<compile_context>
chip_gen: v7x
topology: tpu7x:2x2x1
jax: 0.10.0
libtpu: 0.0.40
codegen_flags: <defaults>
</compile_context>

<pallas_src>
import functools

import jax
import jax.numpy as jnp
import numpy as np
from jax.experimental import pallas as pl
from jax.experimental.pallas import tpu as pltpu


def _cdiv(a, b):
    return -(-a // b)


def _round_up(a, m):
    return _cdiv(a, m) * m


def _spatial_conv_kernel(x_ref, a_ref, w_ref, b_ref, o_ref):
    """One grid step = one lane-block of T = (batch*time) columns.

    x_ref: (C, V, T)      bf16, T lanes (multiple of 128), V nodes in sublanes
    a_ref: (B*V, V)       bf16, [identity (if include_self)] + supports stacked on rows
    w_ref: (B*C*Cout,)    f32 SMEM, folded 1x1-conv weights, index (b, c, o)
    b_ref: (Cout,)        f32 SMEM bias
    o_ref: (Cout, V, T)   f32 output block
    """
    C, V, T = x_ref.shape
    Cout = o_ref.shape[0]
    B = a_ref.shape[0] // V

    # Lane-concat the per-channel (V, T) bf16 slabs -> (V, C*T).  T is a
    # multiple of 128, so every slab lands tile-aligned (no relayout).
    x_wide = jnp.concatenate([x_ref[c] for c in range(C)], axis=-1)

    # ONE stacked MXU pass: identity + all supports along M, bf16 operands,
    # f32 accumulation.  The identity row-block makes the include_self term
    # come out of the same matmul.
    y_wide = jnp.dot(a_ref[...], x_wide,
                     preferred_element_type=jnp.float32)          # (B*V, C*T) f32

    # 1x1 conv (channel mix) + bias on the VPU, f32.  (b, c) outer so only ONE
    # (V, T) slab is live at a time; Cout accumulators seeded with the bias.
    # All slices are tile-aligned (rows at multiples of V, lanes at multiples
    # of T, itself a multiple of 128).
    # TODO(synk): for realistic GRIN hidden sizes (C, Cout ~ 32-64) this mix
    # should move onto the MXU (relayout y_wide for a (B*C)-contraction
    # matmul); the scalar*(V,T) VPU path is only appropriate for tiny C*Cout.
    accs = [jnp.full((V, T), b_ref[o], dtype=jnp.float32) for o in range(Cout)]
    for b in range(B):
        for c in range(C):
            slab = y_wide[b * V:(b + 1) * V, c * T:(c + 1) * T]
            base = (b * C + c) * Cout
            for o in range(Cout):
                accs[o] = accs[o] + w_ref[base + o] * slab
    for o in range(Cout):
        o_ref[o] = accs[o].astype(o_ref.dtype)       # lane-dense (V, T) store


def _tpu_target_info():
    """Generation-aware (min_parallel_steps, vmem_budget_bytes, vmem_limit_bytes).

    v5e / v6e: single TensorCore per chip, 128 MiB VMEM -> one big grid step.
    v7x (and unknown chips, conservatively): 2 TensorCores share the parallel
    grid axis and each has 64 MiB VMEM -> keep an even number of steps and a
    smaller per-step working-set budget.
    """
    kind = ""
    try:
        kind = jax.devices()[0].device_kind.lower()
    except Exception:
        pass
    single_core = ("v5" in kind) or ("v6" in kind)
    vmem_phys = (128 if single_core else 64) * 1024 * 1024
    try:
        vmem_phys = min(vmem_phys, int(pltpu.get_tpu_info().vmem_capacity_bytes))
    except Exception:
        pass
    min_steps = 1 if single_core else 2
    return min_steps, int(vmem_phys * 0.60), int(vmem_phys * 0.75)


def _choose_tiling(n_lanes, bytes_per_lane, min_steps, vmem_budget):
    """Pick (steps, lanes_per_step).  lanes_per_step is a multiple of 128 (so
    every store is lane-dense), the per-step working set stays under
    vmem_budget, and steps is a multiple of min_steps so a 2-TC chip can shard
    the parallel axis evenly."""
    max_t = max(128, (vmem_budget // bytes_per_lane) // 128 * 128)
    steps = max(min_steps, _cdiv(n_lanes, max_t))
    steps = _round_up(steps, min_steps)
    t = _round_up(_cdiv(n_lanes, steps), 128)
    return steps, t


def spatial_conv_order_k(x, supports, weight, bias, *, order=2, include_self=True):
    """x: (N, C, V, L); supports: list of dense (V, V) row-normalized
    adjacencies; weight: (Cout, c_in_total) (the nn.Conv2d(.,.,1) kernel
    squeezed); bias: (Cout,).  Returns (N, Cout, V, L), matching the module."""
    return _spatial_conv_jit(x, tuple(supports), weight, bias, int(order),
                             bool(include_self))


@functools.partial(jax.jit, static_argnums=(4, 5))
def _spatial_conv_jit(x, supports, weight, bias, order, include_self):
    N, C, V, L = x.shape
    S = len(supports)
    Cout, c_in_total = weight.shape
    nb = (1 if include_self else 0) + S + (order - 1)   # blocks forward() emits
    B = (1 if include_self else 0) + S                  # distinct blocks
    assert nb * C <= c_in_total, "forward() would truncate channels; unsupported"

    # ---- fold the order-k weight blocks into the last support's block -------
    # (exact: the forward recomputes einsum(x, a_last) for every order>=2 term,
    # see header note).  Weight columns beyond nb*C multiply zero-padded
    # channels and are dropped.
    w_blocks = weight[:, :nb * C].reshape(Cout, nb, C).transpose(1, 2, 0)   # (nb, C, Cout)
    w_fold = jnp.concatenate(
        [w_blocks[:B - 1], jnp.sum(w_blocks[B - 1:], axis=0, keepdims=True)],
        axis=0)                                                             # (B, C, Cout)
    w_flat = w_fold.reshape(-1).astype(jnp.float32)        # SMEM scalars (b, c, o)

    # ---- grid-invariant MXU operand: [I?, A_1, ..., A_S] stacked on rows -----
    blocks = ([jnp.eye(V, dtype=jnp.bfloat16)] if include_self else [])
    blocks += [jnp.asarray(a, dtype=jnp.bfloat16) for a in supports]
    a_cat = jnp.concatenate(blocks, axis=0)                # (B*V, V) bf16

    # ---- VMEM-budget-derived tiling of the (batch*time) lane axis -----------
    NL = N * L
    min_steps, vmem_budget, vmem_limit = _tpu_target_info()
    bytes_per_lane = V * (2 * C * 2          # double-buffered bf16 input block
                          + 2 * Cout * 4     # double-buffered f32 output block
                          + C * 2            # x_wide (bf16)
                          + B * C * 4        # y_wide (f32)
                          + Cout * 4)        # live mix accumulators
    steps, T = _choose_tiling(NL, bytes_per_lane, min_steps, vmem_budget)
    NL_pad = steps * T

    # ---- layout: (N, C, V, L) -> (C, V, NL_pad), bf16 -----------------------
    # Transpose + cast + pad fuse under jit (no standalone eager dispatches).
    x_r = jnp.transpose(x, (1, 2, 0, 3)).reshape(C, V, NL).astype(jnp.bfloat16)
    if NL_pad != NL:
        x_r = jnp.pad(x_r, ((0, 0), (0, 0), (0, NL_pad - NL)))

    out_r = pl.pallas_call(
        _spatial_conv_kernel,
        out_shape=jax.ShapeDtypeStruct((Cout, V, NL_pad), jnp.float32),
        grid=(steps,),
        in_specs=[
            pl.BlockSpec((C, V, T), lambda g: (0, 0, g)),        # x lane-block
            pl.BlockSpec((B * V, V), lambda g: (0, 0)),          # stacked supports
            pl.BlockSpec(memory_space=pltpu.MemorySpace.SMEM),   # folded 1x1 weights
            pl.BlockSpec(memory_space=pltpu.MemorySpace.SMEM),   # bias
        ],
        out_specs=pl.BlockSpec((Cout, V, T), lambda g: (0, 0, g)),
        compiler_params=pltpu.CompilerParams(
            dimension_semantics=("parallel",),
            vmem_limit_bytes=vmem_limit,
        ),
    )(x_r, a_cat, w_flat, bias.astype(jnp.float32))

    # (Cout, V, NL_pad) -> (N, Cout, V, L); padding lanes dropped, fused under jit.
    out = out_r[:, :, :NL].reshape(Cout, V, N, L).transpose(2, 0, 1, 3)
    return out.astype(x.dtype)


def spatial_conv_order_k_ref(x, supports, weight, bias, *, order=2, include_self=True):
    """Pure-JAX mirror of the PyTorch forward (dense supports)."""
    prec = jax.lax.Precision.HIGHEST
    out = [x] if include_self else []
    for a in supports:
        out.append(jnp.einsum('ncvl,wv->ncwl', x, a, precision=prec))
    a = supports[-1]
    for _ in range(2, order + 1):
        out.append(jnp.einsum('ncvl,wv->ncwl', x, a, precision=prec))
    out = jnp.concatenate(out, axis=1)
    c_exp = weight.shape[1]
    pad = c_exp - out.shape[1]
    if pad > 0:
        out = jnp.pad(out, ((0, 0), (0, pad), (0, 0), (0, 0)))
    elif pad < 0:
        out = out[:, :c_exp]
    y = jnp.einsum('ncvl,oc->novl', out, weight, precision=prec)
    return y + bias[None, :, None, None]


if __name__ == "__main__":
    # Module config: c_in=4, c_out=8, support_len=3, order=2, include_self=True.
    N, C, V, L = 32, 4, 16, 8
    Cout, S, order = 8, 3, 2
    c_in_total = (order * S + 1) * C     # 28 expected input channels of the 1x1 conv

    key = jax.random.PRNGKey(0)
    k1, k2, k3, k4 = jax.random.split(key, 4)

    x = jax.random.normal(k1, (N, C, V, L), dtype=jnp.float32)

    # Dense, row-normalized adjacencies (what compute_support would produce, densified).
    # TODO(synk): the sparse COO supports (torch.sparse.mm path) have no clean
    # Pallas equivalent; supports are handled as dense (V, V) matrices.
    adj = jax.random.uniform(k2, (S, V, V), dtype=jnp.float32)
    supports = [a / (a.sum(axis=1, keepdims=True) + 1e-5) for a in adj]

    # Deterministic synthetic parameters for nn.Conv2d(c_in_total, Cout, kernel_size=1).
    weight = (jax.random.normal(k3, (Cout, c_in_total), dtype=jnp.float32)
              / jnp.sqrt(float(c_in_total)))
    bias = jax.random.normal(k4, (Cout,), dtype=jnp.float32) * 0.1

    out = jax.block_until_ready(
        spatial_conv_order_k(x, supports, weight, bias, order=order))
    ref = spatial_conv_order_k_ref(x, supports, weight, bias, order=order)
    # bf16 x + bf16 MXU operands (f32 accumulation) vs an f32-HIGHEST reference.
    np.testing.assert_allclose(np.asarray(out), np.asarray(ref), rtol=2e-2, atol=2e-2)

    # Second shape whose N*L is NOT a multiple of 128: exercises the explicit
    # lane-padding path (no masked-store fallback).
    x2 = jax.random.normal(k1, (3, C, V, L), dtype=jnp.float32)
    out2 = jax.block_until_ready(
        spatial_conv_order_k(x2, supports, weight, bias, order=order))
    ref2 = spatial_conv_order_k_ref(x2, supports, weight, bias, order=order)
    np.testing.assert_allclose(np.asarray(out2), np.asarray(ref2), rtol=2e-2, atol=2e-2)

    print("KERNEL_OK")
</pallas_src>

<mosaic_0001>
module attributes {stable_mosaic.version = 11 : i64} {
  func.func @_spatial_conv_kernel(%arg0: i32, %arg1: memref<4x16x128xbf16, #tpu.memory_space<vmem>>, %arg2: memref<64x16xbf16, #tpu.memory_space<vmem>>, %arg3: memref<128xf32, #tpu.memory_space<smem>>, %arg4: memref<8xf32, #tpu.memory_space<smem>>, %arg5: memref<8x16x128xf32, #tpu.memory_space<vmem>>) attributes {dimension_semantics = [#tpu.dimension_semantics<parallel>], iteration_bounds = array<i64: 2>, scalar_prefetch = 0 : i64, scratch_operands = 0 : i64, tpu.core_type = #tpu.core_type<tc>, window_params = [{transform_indices = @transform_0, window_bounds = array<i64: 4, 16, 128>}, {pipeline_mode = #tpu.pipeline_mode<synchronous>, transform_indices = @transform_1, window_bounds = array<i64: 64, 16>}, {transform_indices = @transform_2, window_bounds = array<i64: 128>}, {transform_indices = @transform_3, window_bounds = array<i64: 8>}, {transform_indices = @transform_4, window_bounds = array<i64: 8, 16, 128>}]} {
    %c0 = arith.constant 0 : index
    %c0_0 = arith.constant 0 : index
    %c0_1 = arith.constant 0 : index
    %0 = vector.load %arg1[%c0, %c0_0, %c0_1] : memref<4x16x128xbf16, #tpu.memory_space<vmem>>, vector<1x16x128xbf16>
    %1 = vector.shape_cast %0 : vector<1x16x128xbf16> to vector<16x128xbf16>
    %c1 = arith.constant 1 : index
    %c0_2 = arith.constant 0 : index
    %c0_3 = arith.constant 0 : index
    %2 = vector.load %arg1[%c1, %c0_2, %c0_3] : memref<4x16x128xbf16, #tpu.memory_space<vmem>>, vector<1x16x128xbf16>
    %3 = vector.shape_cast %2 : vector<1x16x128xbf16> to vector<16x128xbf16>
    %c2 = arith.constant 2 : index
    %c0_4 = arith.constant 0 : index
    %c0_5 = arith.constant 0 : index
    %4 = vector.load %arg1[%c2, %c0_4, %c0_5] : memref<4x16x128xbf16, #tpu.memory_space<vmem>>, vector<1x16x128xbf16>
    %5 = vector.shape_cast %4 : vector<1x16x128xbf16> to vector<16x128xbf16>
    %c3 = arith.constant 3 : index
    %c0_6 = arith.constant 0 : index
    %c0_7 = arith.constant 0 : index
    %6 = vector.load %arg1[%c3, %c0_6, %c0_7] : memref<4x16x128xbf16, #tpu.memory_space<vmem>>, vector<1x16x128xbf16>
    %7 = vector.shape_cast %6 : vector<1x16x128xbf16> to vector<16x128xbf16>
    %8 = tpu.concatenate %1, %3, %5, %7 in 1 : vector<16x128xbf16>, vector<16x128xbf16>, vector<16x128xbf16>, vector<16x128xbf16> -> vector<16x512xbf16>
    %c0_8 = arith.constant 0 : index
    %c0_9 = arith.constant 0 : index
    %9 = vector.load %arg2[%c0_8, %c0_9] : memref<64x16xbf16, #tpu.memory_space<vmem>>, vector<64x16xbf16>
    %cst = arith.constant dense<0.000000e+00> : vector<64x512xf32>
    %10 = tpu.matmul %9, %8, %cst {dimension_numbers = #tpu.dot_dimension_numbers<[1], [0], [0], [1], [0, 0, 1, 1], [], []>} : vector<64x16xbf16>, vector<16x512xbf16>, vector<64x512xf32> -> vector<64x512xf32>
    %c0_10 = arith.constant 0 : index
    %11 = memref.load %arg4[%c0_10] : memref<8xf32, #tpu.memory_space<smem>>
    %12 = vector.broadcast %11 : f32 to vector<16x128xf32>
    %c1_11 = arith.constant 1 : index
    %13 = memref.load %arg4[%c1_11] : memref<8xf32, #tpu.memory_space<smem>>
    %14 = vector.broadcast %13 : f32 to vector<16x128xf32>
    %c2_12 = arith.constant 2 : index
    %15 = memref.load %arg4[%c2_12] : memref<8xf32, #tpu.memory_space<smem>>
    %16 = vector.broadcast %15 : f32 to vector<16x128xf32>
    %c3_13 = arith.constant 3 : index
    %17 = memref.load %arg4[%c3_13] : memref<8xf32, #tpu.memory_space<smem>>
    %18 = vector.broadcast %17 : f32 to vector<16x128xf32>
    %c4 = arith.constant 4 : index
    %19 = memref.load %arg4[%c4] : memref<8xf32, #tpu.memory_space<smem>>
    %20 = vector.broadcast %19 : f32 to vector<16x128xf32>
    %c5 = arith.constant 5 : index
    %21 = memref.load %arg4[%c5] : memref<8xf32, #tpu.memory_space<smem>>
    %22 = vector.broadcast %21 : f32 to vector<16x128xf32>
    %c6 = arith.constant 6 : index
    %23 = memref.load %arg4[%c6] : memref<8xf32, #tpu.memory_space<smem>>
    %24 = vector.broadcast %23 : f32 to vector<16x128xf32>
    %c7 = arith.constant 7 : index
    %25 = memref.load %arg4[%c7] : memref<8xf32, #tpu.memory_space<smem>>
    %26 = vector.broadcast %25 : f32 to vector<16x128xf32>
    %27 = vector.extract_strided_slice %10 {offsets = [0, 0], sizes = [16, 128], strides = [1, 1]} : vector<64x512xf32> to vector<16x128xf32>
    %c0_14 = arith.constant 0 : index
    %28 = memref.load %arg3[%c0_14] : memref<128xf32, #tpu.memory_space<smem>>
    %29 = vector.broadcast %28 : f32 to vector<16x128xf32>
    %30 = arith.mulf %29, %27 : vector<16x128xf32>
    %31 = arith.addf %12, %30 : vector<16x128xf32>
    %c1_15 = arith.constant 1 : index
    %32 = memref.load %arg3[%c1_15] : memref<128xf32, #tpu.memory_space<smem>>
    %33 = vector.broadcast %32 : f32 to vector<16x128xf32>
    %34 = arith.mulf %33, %27 : vector<16x128xf32>
    %35 = arith.addf %14, %34 : vector<16x128xf32>
    %c2_16 = arith.constant 2 : index
    %36 = memref.load %arg3[%c2_16] : memref<128xf32, #tpu.memory_space<smem>>
    %37 = vector.broadcast %36 : f32 to vector<16x128xf32>
    %38 = arith.mulf %37, %27 : vector<16x128xf32>
    %39 = arith.addf %16, %38 : vector<16x128xf32>
    %c3_17 = arith.constant 3 : index
    %40 = memref.load %arg3[%c3_17] : memref<128xf32, #tpu.memory_space<smem>>
    %41 = vector.broadcast %40 : f32 to vector<16x128xf32>
    %42 = arith.mulf %41, %27 : vector<16x128xf32>
    %43 = arith.addf %18, %42 : vector<16x128xf32>
    %c4_18 = arith.constant 4 : index
    %44 = memref.load %arg3[%c4_18] : memref<128xf32, #tpu.memory_space<smem>>
    %45 = vector.broadcast %44 : f32 to vector<16x128xf32>
    %46 = arith.mulf %45, %27 : vector<16x128xf32>
    %47 = arith.addf %20, %46 : vector<16x128xf32>
    %c5_19 = arith.constant 5 : index
    %48 = memref.load %arg3[%c5_19] : memref<128xf32, #tpu.memory_space<smem>>
    %49 = vector.broadcast %48 : f32 to vector<16x128xf32>
    %50 = arith.mulf %49, %27 : vector<16x128xf32>
    %51 = arith.addf %22, %50 : vector<16x128xf32>
    %c6_20 = arith.constant 6 : index
    %52 = memref.load %arg3[%c6_20] : memref<128xf32, #tpu.memory_space<smem>>
    %53 = vector.broadcast %52 : f32 to vector<16x128xf32>
    %54 = arith.mulf %53, %27 : vector<16x128xf32>
    %55 = arith.addf %24, %54 : vector<16x128xf32>
    %c7_21 = arith.constant 7 : index
    %56 = memref.load %arg3[%c7_21] : memref<128xf32, #tpu.memory_space<smem>>
    %57 = vector.broadcast %56 : f32 to vector<16x128xf32>
    %58 = arith.mulf %57, %27 : vector<16x128xf32>
    %59 = arith.addf %26, %58 : vector<16x128xf32>
    %60 = vector.extract_strided_slice %10 {offsets = [0, 128], sizes = [16, 128], strides = [1, 1]} : vector<64x512xf32> to vector<16x128xf32>
    %c8 = arith.constant 8 : index
    %61 = memref.load %arg3[%c8] : memref<128xf32, #tpu.memory_space<smem>>
    %62 = vector.broadcast %61 : f32 to vector<16x128xf32>
    %63 = arith.mulf %62, %60 : vector<16x128xf32>
    %64 = arith.addf %31, %63 : vector<16x128xf32>
    %c9 = arith.constant 9 : index
    %65 = memref.load %arg3[%c9] : memref<128xf32, #tpu.memory_space<smem>>
    %66 = vector.broadcast %65 : f32 to vector<16x128xf32>
    %67 = arith.mulf %66, %60 : vector<16x128xf32>
    %68 = arith.addf %35, %67 : vector<16x128xf32>
    %c10 = arith.constant 10 : index
    %69 = memref.load %arg3[%c10] : memref<128xf32, #tpu.memory_space<smem>>
    %70 = vector.broadcast %69 : f32 to vector<16x128xf32>
    %71 = arith.mulf %70, %60 : vector<16x128xf32>
    %72 = arith.addf %39, %71 : vector<16x128xf32>
    %c11 = arith.constant 11 : index
    %73 = memref.load %arg3[%c11] : memref<128xf32, #tpu.memory_space<smem>>
    %74 = vector.broadcast %73 : f32 to vector<16x128xf32>
    %75 = arith.mulf %74, %60 : vector<16x128xf32>
    %76 = arith.addf %43, %75 : vector<16x128xf32>
    %c12 = arith.constant 12 : index
    %77 = memref.load %arg3[%c12] : memref<128xf32, #tpu.memory_space<smem>>
    %78 = vector.broadcast %77 : f32 to vector<16x128xf32>
    %79 = arith.mulf %78, %60 : vector<16x128xf32>
    %80 = arith.addf %47, %79 : vector<16x128xf32>
    %c13 = arith.constant 13 : index
    %81 = memref.load %arg3[%c13] : memref<128xf32, #tpu.memory_space<smem>>
    %82 = vector.broadcast %81 : f32 to vector<16x128xf32>
    %83 = arith.mulf %82, %60 : vector<16x128xf32>
    %84 = arith.addf %51, %83 : vector<16x128xf32>
    %c14 = arith.constant 14 : index
    %85 = memref.load %arg3[%c14] : memref<128xf32, #tpu.memory_space<smem>>
    %86 = vector.broadcast %85 : f32 to vector<16x128xf32>
    %87 = arith.mulf %86, %60 : vector<16x128xf32>
    %88 = arith.addf %55, %87 : vector<16x128xf32>
    %c15 = arith.constant 15 : index
    %89 = memref.load %arg3[%c15] : memref<128xf32, #tpu.memory_space<smem>>
    %90 = vector.broadcast %89 : f32 to vector<16x128xf32>
    %91 = arith.mulf %90, %60 : vector<16x128xf32>
    %92 = arith.addf %59, %91 : vector<16x128xf32>
    %93 = vector.extract_strided_slice %10 {offsets = [0, 256], sizes = [16, 128], strides = [1, 1]} : vector<64x512xf32> to vector<16x128xf32>
    %c16 = arith.constant 16 : index
    %94 = memref.load %arg3[%c16] : memref<128xf32, #tpu.memory_space<smem>>
    %95 = vector.broadcast %94 : f32 to vector<16x128xf32>
    %96 = arith.mulf %95, %93 : vector<16x128xf32>
    %97 = arith.addf %64, %96 : vector<16x128xf32>
    %c17 = arith.constant 17 : index
    %98 = memref.load %arg3[%c17] : memref<128xf32, #tpu.memory_space<smem>>
    %99 = vector.broadcast %98 : f32 to vector<16x128xf32>
    %100 = arith.mulf %99, %93 : vector<16x128xf32>
    %101 = arith.addf %68, %100 : vector<16x128xf32>
    %c18 = arith.constant 18 : index
    %102 = memref.load %arg3[%c18] : memref<128xf32, #tpu.memory_space<smem>>
    %103 = vector.broadcast %102 : f32 to vector<16x128xf32>
    %104 = arith.mulf %103, %93 : vector<16x128xf32>
    %105 = arith.addf %72, %104 : vector<16x128xf32>
    %c19 = arith.constant 19 : index
    %106 = memref.load %arg3[%c19] : memref<128xf32, #tpu.memory_space<smem>>
    %107 = vector.broadcast %106 : f32 to vector<16x128xf32>
    %108 = arith.mulf %107, %93 : vector<16x128xf32>
    %109 = arith.addf %76, %108 : vector<16x128xf32>
    %c20 = arith.constant 20 : index
    %110 = memref.load %arg3[%c20] : memref<128xf32, #tpu.memory_space<smem>>
    %111 = vector.broadcast %110 : f32 to vector<16x128xf32>
    %112 = arith.mulf %111, %93 : vector<16x128xf32>
    %113 = arith.addf %80, %112 : vector<16x128xf32>
    %c21 = arith.constant 21 : index
    %114 = memref.load %arg3[%c21] : memref<128xf32, #tpu.memory_space<smem>>
    %115 = vector.broadcast %114 : f32 to vector<16x128xf32>
    %116 = arith.mulf %115, %93 : vector<16x128xf32>
    %117 = arith.addf %84, %116 : vector<16x128xf32>
    %c22 = arith.constant 22 : index
    %118 = memref.load %arg3[%c22] : memref<128xf32, #tpu.memory_space<smem>>
    %119 = vector.broadcast %118 : f32 to vector<16x128xf32>
    %120 = arith.mulf %119, %93 : vector<16x128xf32>
    %121 = arith.addf %88, %120 : vector<16x128xf32>
    %c23 = arith.constant 23 : index
    %122 = memref.load %arg3[%c23] : memref<128xf32, #tpu.memory_space<smem>>
    %123 = vector.broadcast %122 : f32 to vector<16x128xf32>
    %124 = arith.mulf %123, %93 : vector<16x128xf32>
    %125 = arith.addf %92, %124 : vector<16x128xf32>
    %126 = vector.extract_strided_slice %10 {offsets = [0, 384], sizes = [16, 128], strides = [1, 1]} : vector<64x512xf32> to vector<16x128xf32>
    %c24 = arith.constant 24 : index
    %127 = memref.load %arg3[%c24] : memref<128xf32, #tpu.memory_space<smem>>
    %128 = vector.broadcast %127 : f32 to vector<16x128xf32>
    %129 = arith.mulf %128, %126 : vector<16x128xf32>
    %130 = arith.addf %97, %129 : vector<16x128xf32>
    %c25 = arith.constant 25 : index
    %131 = memref.load %arg3[%c25] : memref<128xf32, #tpu.memory_space<smem>>
    %132 = vector.broadcast %131 : f32 to vector<16x128xf32>
    %133 = arith.mulf %132, %126 : vector<16x128xf32>
    %134 = arith.addf %101, %133 : vector<16x128xf32>
    %c26 = arith.constant 26 : index
    %135 = memref.load %arg3[%c26] : memref<128xf32, #tpu.memory_space<smem>>
    %136 = vector.broadcast %135 : f32 to vector<16x128xf32>
    %137 = arith.mulf %136, %126 : vector<16x128xf32>
    %138 = arith.addf %105, %137 : vector<16x128xf32>
    %c27 = arith.constant 27 : index
    %139 = memref.load %arg3[%c27] : memref<128xf32, #tpu.memory_space<smem>>
    %140 = vector.broadcast %139 : f32 to vector<16x128xf32>
    %141 = arith.mulf %140, %126 : vector<16x128xf32>
    %142 = arith.addf %109, %141 : vector<16x128xf32>
    %c28 = arith.constant 28 : index
    %143 = memref.load %arg3[%c28] : memref<128xf32, #tpu.memory_space<smem>>
    %144 = vector.broadcast %143 : f32 to vector<16x128xf32>
    %145 = arith.mulf %144, %126 : vector<16x128xf32>
    %146 = arith.addf %113, %145 : vector<16x128xf32>
    %c29 = arith.constant 29 : index
    %147 = memref.load %arg3[%c29] : memref<128xf32, #tpu.memory_space<smem>>
    %148 = vector.broadcast %147 : f32 to vector<16x128xf32>
    %149 = arith.mulf %148, %126 : vector<16x128xf32>
    %150 = arith.addf %117, %149 : vector<16x128xf32>
    %c30 = arith.constant 30 : index
    %151 = memref.load %arg3[%c30] : memref<128xf32, #tpu.memory_space<smem>>
    %152 = vector.broadcast %151 : f32 to vector<16x128xf32>
    %153 = arith.mulf %152, %126 : vector<16x128xf32>
    %154 = arith.addf %121, %153 : vector<16x128xf32>
    %c31 = arith.constant 31 : index
    %155 = memref.load %arg3[%c31] : memref<128xf32, #tpu.memory_space<smem>>
    %156 = vector.broadcast %155 : f32 to vector<16x128xf32>
    %157 = arith.mulf %156, %126 : vector<16x128xf32>
    %158 = arith.addf %125, %157 : vector<16x128xf32>
    %159 = vector.extract_strided_slice %10 {offsets = [16, 0], sizes = [16, 128], strides = [1, 1]} : vector<64x512xf32> to vector<16x128xf32>
    %c32 = arith.constant 32 : index
    %160 = memref.load %arg3[%c32] : memref<128xf32, #tpu.memory_space<smem>>
    %161 = vector.broadcast %160 : f32 to vector<16x128xf32>
    %162 = arith.mulf %161, %159 : vector<16x128xf32>
    %163 = arith.addf %130, %162 : vector<16x128xf32>
    %c33 = arith.constant 33 : index
    %164 = memref.load %arg3[%c33] : memref<128xf32, #tpu.memory_space<smem>>
    %165 = vector.broadcast %164 : f32 to vector<16x128xf32>
    %166 = arith.mulf %165, %159 : vector<16x128xf32>
    %167 = arith.addf %134, %166 : vector<16x128xf32>
    %c34 = arith.constant 34 : index
    %168 = memref.load %arg3[%c34] : memref<128xf32, #tpu.memory_space<smem>>
    %169 = vector.broadcast %168 : f32 to vector<16x128xf32>
    %170 = arith.mulf %169, %159 : vector<16x128xf32>
    %171 = arith.addf %138, %170 : vector<16x128xf32>
    %c35 = arith.constant 35 : index
    %172 = memref.load %arg3[%c35] : memref<128xf32, #tpu.memory_space<smem>>
    %173 = vector.broadcast %172 : f32 to vector<16x128xf32>
    %174 = arith.mulf %173, %159 : vector<16x128xf32>
    %175 = arith.addf %142, %174 : vector<16x128xf32>
    %c36 = arith.constant 36 : index
    %176 = memref.load %arg3[%c36] : memref<128xf32, #tpu.memory_space<smem>>
    %177 = vector.broadcast %176 : f32 to vector<16x128xf32>
    %178 = arith.mulf %177, %159 : vector<16x128xf32>
    %179 = arith.addf %146, %178 : vector<16x128xf32>
    %c37 = arith.constant 37 : index
    %180 = memref.load %arg3[%c37] : memref<128xf32, #tpu.memory_space<smem>>
    %181 = vector.broadcast %180 : f32 to vector<16x128xf32>
    %182 = arith.mulf %181, %159 : vector<16x128xf32>
    %183 = arith.addf %150, %182 : vector<16x128xf32>
    %c38 = arith.constant 38 : index
    %184 = memref.load %arg3[%c38] : memref<128xf32, #tpu.memory_space<smem>>
    %185 = vector.broadcast %184 : f32 to vector<16x128xf32>
    %186 = arith.mulf %185, %159 : vector<16x128xf32>
    %187 = arith.addf %154, %186 : vector<16x128xf32>
    %c39 = arith.constant 39 : index
    %188 = memref.load %arg3[%c39] : memref<128xf32, #tpu.memory_space<smem>>
    %189 = vector.broadcast %188 : f32 to vector<16x128xf32>
    %190 = arith.mulf %189, %159 : vector<16x128xf32>
    %191 = arith.addf %158, %190 : vector<16x128xf32>
    %192 = vector.extract_strided_slice %10 {offsets = [16, 128], sizes = [16, 128], strides = [1, 1]} : vector<64x512xf32> to vector<16x128xf32>
    %c40 = arith.constant 40 : index
    %193 = memref.load %arg3[%c40] : memref<128xf32, #tpu.memory_space<smem>>
    %194 = vector.broadcast %193 : f32 to vector<16x128xf32>
    %195 = arith.mulf %194, %192 : vector<16x128xf32>
    %196 = arith.addf %163, %195 : vector<16x128xf32>
    %c41 = arith.constant 41 : index
    %197 = memref.load %arg3[%c41] : memref<128xf32, #tpu.memory_space<smem>>
    %198 = vector.broadcast %197 : f32 to vector<16x128xf32>
    %199 = arith.mulf %198, %192 : vector<16x128xf32>
    %200 = arith.addf %167, %199 : vector<16x128xf32>
    %c42 = arith.constant 42 : index
    %201 = memref.load %arg3[%c42] : memref<128xf32, #tpu.memory_space<smem>>
    %202 = vector.broadcast %201 : f32 to vector<16x128xf32>
    %203 = arith.mulf %202, %192 : vector<16x128xf32>
    %204 = arith.addf %171, %203 : vector<16x128xf32>
    %c43 = arith.constant 43 : index
    %205 = memref.load %arg3[%c43] : memref<128xf32, #tpu.memory_space<smem>>
    %206 = vector.broadcast %205 : f32 to vector<16x128xf32>
    %207 = arith.mulf %206, %192 : vector<16x128xf32>
    %208 = arith.addf %175, %207 : vector<16x128xf32>
    %c44 = arith.constant 44 : index
    %209 = memref.load %arg3[%c44] : memref<128xf32, #tpu.memory_space<smem>>
    %210 = vector.broadcast %209 : f32 to vector<16x128xf32>
    %211 = arith.mulf %210, %192 : vector<16x128xf32>
    %212 = arith.addf %179, %211 : vector<16x128xf32>
    %c45 = arith.constant 45 : index
    %213 = memref.load %arg3[%c45] : memref<128xf32, #tpu.memory_space<smem>>
    %214 = vector.broadcast %213 : f32 to vector<16x128xf32>
    %215 = arith.mulf %214, %192 : vector<16x128xf32>
    %216 = arith.addf %183, %215 : vector<16x128xf32>
    %c46 = arith.constant 46 : index
    %217 = memref.load %arg3[%c46] : memref<128xf32, #tpu.memory_space<smem>>
    %218 = vector.broadcast %217 : f32 to vector<16x128xf32>
    %219 = arith.mulf %218, %192 : vector<16x128xf32>
    %220 = arith.addf %187, %219 : vector<16x128xf32>
    %c47 = arith.constant 47 : index
    %221 = memref.load %arg3[%c47] : memref<128xf32, #tpu.memory_space<smem>>
    %222 = vector.broadcast %221 : f32 to vector<16x128xf32>
    %223 = arith.mulf %222, %192 : vector<16x128xf32>
    %224 = arith.addf %191, %223 : vector<16x128xf32>
    %225 = vector.extract_strided_slice %10 {offsets = [16, 256], sizes = [16, 128], strides = [1, 1]} : vector<64x512xf32> to vector<16x128xf32>
    %c48 = arith.constant 48 : index
    %226 = memref.load %arg3[%c48] : memref<128xf32, #tpu.memory_space<smem>>
    %227 = vector.broadcast %226 : f32 to vector<16x128xf32>
    %228 = arith.mulf %227, %225 : vector<16x128xf32>
    %229 = arith.addf %196, %228 : vector<16x128xf32>
    %c49 = arith.constant 49 : index
    %230 = memref.load %arg3[%c49] : memref<128xf32, #tpu.memory_space<smem>>
    %231 = vector.broadcast %230 : f32 to vector<16x128xf32>
    %232 = arith.mulf %231, %225 : vector<16x128xf32>
    %233 = arith.addf %200, %232 : vector<16x128xf32>
    %c50 = arith.constant 50 : index
    %234 = memref.load %arg3[%c50] : memref<128xf32, #tpu.memory_space<smem>>
    %235 = vector.broadcast %234 : f32 to vector<16x128xf32>
    %236 = arith.mulf %235, %225 : vector<16x128xf32>
    %237 = arith.addf %204, %236 : vector<16x128xf32>
    %c51 = arith.constant 51 : index
    %238 = memref.load %arg3[%c51] : memref<128xf32, #tpu.memory_space<smem>>
    %239 = vector.broadcast %238 : f32 to vector<16x128xf32>
    %240 = arith.mulf %239, %225 : vector<16x128xf32>
    %241 = arith.addf %208, %240 : vector<16x128xf32>
    %c52 = arith.constant 52 : index
    %242 = memref.load %arg3[%c52] : memref<128xf32, #tpu.memory_space<smem>>
    %243 = vector.broadcast %242 : f32 to vector<16x128xf32>
    %244 = arith.mulf %243, %225 : vector<16x128xf32>
    %245 = arith.addf %212, %244 : vector<16x128xf32>
    %c53 = arith.constant 53 : index
    %246 = memref.load %arg3[%c53] : memref<128xf32, #tpu.memory_space<smem>>
    %247 = vector.broadcast %246 : f32 to vector<16x128xf32>
    %248 = arith.mulf %247, %225 : vector<16x128xf32>
    %249 = arith.addf %216, %248 : vector<16x128xf32>
    %c54 = arith.constant 54 : index
    %250 = memref.load %arg3[%c54] : memref<128xf32, #tpu.memory_space<smem>>
    %251 = vector.broadcast %250 : f32 to vector<16x128xf32>
    %252 = arith.mulf %251, %225 : vector<16x128xf32>
    %253 = arith.addf %220, %252 : vector<16x128xf32>
    %c55 = arith.constant 55 : index
    %254 = memref.load %arg3[%c55] : memref<128xf32, #tpu.memory_space<smem>>
    %255 = vector.broadcast %254 : f32 to vector<16x128xf32>
    %256 = arith.mulf %255, %225 : vector<16x128xf32>
    %257 = arith.addf %224, %256 : vector<16x128xf32>
    %258 = vector.extract_strided_slice %10 {offsets = [16, 384], sizes = [16, 128], strides = [1, 1]} : vector<64x512xf32> to vector<16x128xf32>
    %c56 = arith.constant 56 : index
    %259 = memref.load %arg3[%c56] : memref<128xf32, #tpu.memory_space<smem>>
    %260 = vector.broadcast %259 : f32 to vector<16x128xf32>
    %261 = arith.mulf %260, %258 : vector<16x128xf32>
    %262 = arith.addf %229, %261 : vector<16x128xf32>
    %c57 = arith.constant 57 : index
    %263 = memref.load %arg3[%c57] : memref<128xf32, #tpu.memory_space<smem>>
    %264 = vector.broadcast %263 : f32 to vector<16x128xf32>
    %265 = arith.mulf %264, %258 : vector<16x128xf32>
    %266 = arith.addf %233, %265 : vector<16x128xf32>
    %c58 = arith.constant 58 : index
    %267 = memref.load %arg3[%c58] : memref<128xf32, #tpu.memory_space<smem>>
    %268 = vector.broadcast %267 : f32 to vector<16x128xf32>
    %269 = arith.mulf %268, %258 : vector<16x128xf32>
    %270 = arith.addf %237, %269 : vector<16x128xf32>
    %c59 = arith.constant 59 : index
    %271 = memref.load %arg3[%c59] : memref<128xf32, #tpu.memory_space<smem>>
    %272 = vector.broadcast %271 : f32 to vector<16x128xf32>
    %273 = arith.mulf %272, %258 : vector<16x128xf32>
    %274 = arith.addf %241, %273 : vector<16x128xf32>
    %c60 = arith.constant 60 : index
    %275 = memref.load %arg3[%c60] : memref<128xf32, #tpu.memory_space<smem>>
    %276 = vector.broadcast %275 : f32 to vector<16x128xf32>
    %277 = arith.mulf %276, %258 : vector<16x128xf32>
    %278 = arith.addf %245, %277 : vector<16x128xf32>
    %c61 = arith.constant 61 : index
    %279 = memref.load %arg3[%c61] : memref<128xf32, #tpu.memory_space<smem>>
    %280 = vector.broadcast %279 : f32 to vector<16x128xf32>
    %281 = arith.mulf %280, %258 : vector<16x128xf32>
    %282 = arith.addf %249, %281 : vector<16x128xf32>
    %c62 = arith.constant 62 : index
    %283 = memref.load %arg3[%c62] : memref<128xf32, #tpu.memory_space<smem>>
    %284 = vector.broadcast %283 : f32 to vector<16x128xf32>
    %285 = arith.mulf %284, %258 : vector<16x128xf32>
    %286 = arith.addf %253, %285 : vector<16x128xf32>
    %c63 = arith.constant 63 : index
    %287 = memref.load %arg3[%c63] : memref<128xf32, #tpu.memory_space<smem>>
    %288 = vector.broadcast %287 : f32 to vector<16x128xf32>
    %289 = arith.mulf %288, %258 : vector<16x128xf32>
    %290 = arith.addf %257, %289 : vector<16x128xf32>
    %291 = vector.extract_strided_slice %10 {offsets = [32, 0], sizes = [16, 128], strides = [1, 1]} : vector<64x512xf32> to vector<16x128xf32>
    %c64 = arith.constant 64 : index
    %292 = memref.load %arg3[%c64] : memref<128xf32, #tpu.memory_space<smem>>
    %293 = vector.broadcast %292 : f32 to vector<16x128xf32>
    %294 = arith.mulf %293, %291 : vector<16x128xf32>
    %295 = arith.addf %262, %294 : vector<16x128xf32>
    %c65 = arith.constant 65 : index
    %296 = memref.load %arg3[%c65] : memref<128xf32, #tpu.memory_space<smem>>
    %297 = vector.broadcast %296 : f32 to vector<16x128xf32>
    %298 = arith.mulf %297, %291 : vector<16x128xf32>
    %299 = arith.addf %266, %298 : vector<16x128xf32>
    %c66 = arith.constant 66 : index
    %300 = memref.load %arg3[%c66] : memref<128xf32, #tpu.memory_space<smem>>
    %301 = vector.broadcast %300 : f32 to vector<16x128xf32>
    %302 = arith.mulf %301, %291 : vector<16x128xf32>
    %303 = arith.addf %270, %302 : vector<16x128xf32>
    %c67 = arith.constant 67 : index
    %304 = memref.load %arg3[%c67] : memref<128xf32, #tpu.memory_space<smem>>
    %305 = vector.broadcast %304 : f32 to vector<16x128xf32>
    %306 = arith.mulf %305, %291 : vector<16x128xf32>
    %307 = arith.addf %274, %306 : vector<16x128xf32>
    %c68 = arith.constant 68 : index
    %308 = memref.load %arg3[%c68] : memref<128xf32, #tpu.memory_space<smem>>
    %309 = vector.broadcast %308 : f32 to vector<16x128xf32>
    %310 = arith.mulf %309, %291 : vector<16x128xf32>
    %311 = arith.addf %278, %310 : vector<16x128xf32>
    %c69 = arith.constant 69 : index
    %312 = memref.load %arg3[%c69] : memref<128xf32, #tpu.memory_space<smem>>
    %313 = vector.broadcast %312 : f32 to vector<16x128xf32>
    %314 = arith.mulf %313, %291 : vector<16x128xf32>
    %315 = arith.addf %282, %314 : vector<16x128xf32>
    %c70 = arith.constant 70 : index
    %316 = memref.load %arg3[%c70] : memref<128xf32, #tpu.memory_space<smem>>
    %317 = vector.broadcast %316 : f32 to vector<16x128xf32>
    %318 = arith.mulf %317, %291 : vector<16x128xf32>
    %319 = arith.addf %286, %318 : vector<16x128xf32>
    %c71 = arith.constant 71 : index
    %320 = memref.load %arg3[%c71] : memref<128xf32, #tpu.memory_space<smem>>
    %321 = vector.broadcast %320 : f32 to vector<16x128xf32>
    %322 = arith.mulf %321, %291 : vector<16x128xf32>
    %323 = arith.addf %290, %322 : vector<16x128xf32>
    %324 = vector.extract_strided_slice %10 {offsets = [32, 128], sizes = [16, 128], strides = [1, 1]} : vector<64x512xf32> to vector<16x128xf32>
    %c72 = arith.constant 72 : index
    %325 = memref.load %arg3[%c72] : memref<128xf32, #tpu.memory_space<smem>>
    %326 = vector.broadcast %325 : f32 to vector<16x128xf32>
    %327 = arith.mulf %326, %324 : vector<16x128xf32>
    %328 = arith.addf %295, %327 : vector<16x128xf32>
    %c73 = arith.constant 73 : index
    %329 = memref.load %arg3[%c73] : memref<128xf32, #tpu.memory_space<smem>>
    %330 = vector.broadcast %329 : f32 to vector<16x128xf32>
    %331 = arith.mulf %330, %324 : vector<16x128xf32>
    %332 = arith.addf %299, %331 : vector<16x128xf32>
    %c74 = arith.constant 74 : index
    %333 = memref.load %arg3[%c74] : memref<128xf32, #tpu.memory_space<smem>>
    %334 = vector.broadcast %333 : f32 to vector<16x128xf32>
    %335 = arith.mulf %334, %324 : vector<16x128xf32>
    %336 = arith.addf %303, %335 : vector<16x128xf32>
    %c75 = arith.constant 75 : index
    %337 = memref.load %arg3[%c75] : memref<128xf32, #tpu.memory_space<smem>>
    %338 = vector.broadcast %337 : f32 to vector<16x128xf32>
    %339 = arith.mulf %338, %324 : vector<16x128xf32>
    %340 = arith.addf %307, %339 : vector<16x128xf32>
    %c76 = arith.constant 76 : index
    %341 = memref.load %arg3[%c76] : memref<128xf32, #tpu.memory_space<smem>>
    %342 = vector.broadcast %341 : f32 to vector<16x128xf32>
    %343 = arith.mulf %342, %324 : vector<16x128xf32>
    %344 = arith.addf %311, %343 : vector<16x128xf32>
    %c77 = arith.constant 77 : index
    %345 = memref.load %arg3[%c77] : memref<128xf32, #tpu.memory_space<smem>>
    %346 = vector.broadcast %345 : f32 to vector<16x128xf32>
    %347 = arith.mulf %346, %324 : vector<16x128xf32>
    %348 = arith.addf %315, %347 : vector<16x128xf32>
    %c78 = arith.constant 78 : index
    %349 = memref.load %arg3[%c78] : memref<128xf32, #tpu.memory_space<smem>>
    %350 = vector.broadcast %349 : f32 to vector<16x128xf32>
    %351 = arith.mulf %350, %324 : vector<16x128xf32>
    %352 = arith.addf %319, %351 : vector<16x128xf32>
    %c79 = arith.constant 79 : index
    %353 = memref.load %arg3[%c79] : memref<128xf32, #tpu.memory_space<smem>>
    %354 = vector.broadcast %353 : f32 to vector<16x128xf32>
    %355 = arith.mulf %354, %324 : vector<16x128xf32>
    %356 = arith.addf %323, %355 : vector<16x128xf32>
    %357 = vector.extract_strided_slice %10 {offsets = [32, 256], sizes = [16, 128], strides = [1, 1]} : vector<64x512xf32> to vector<16x128xf32>
    %c80 = arith.constant 80 : index
    %358 = memref.load %arg3[%c80] : memref<128xf32, #tpu.memory_space<smem>>
    %359 = vector.broadcast %358 : f32 to vector<16x128xf32>
    %360 = arith.mulf %359, %357 : vector<16x128xf32>
    %361 = arith.addf %328, %360 : vector<16x128xf32>
    %c81 = arith.constant 81 : index
    %362 = memref.load %arg3[%c81] : memref<128xf32, #tpu.memory_space<smem>>
    %363 = vector.broadcast %362 : f32 to vector<16x128xf32>
    %364 = arith.mulf %363, %357 : vector<16x128xf32>
    %365 = arith.addf %332, %364 : vector<16x128xf32>
    %c82 = arith.constant 82 : index
    %366 = memref.load %arg3[%c82] : memref<128xf32, #tpu.memory_space<smem>>
    %367 = vector.broadcast %366 : f32 to vector<16x128xf32>
    %368 = arith.mulf %367, %357 : vector<16x128xf32>
    %369 = arith.addf %336, %368 : vector<16x128xf32>
    %c83 = arith.constant 83 : index
    %370 = memref.load %arg3[%c83] : memref<128xf32, #tpu.memory_space<smem>>
    %371 = vector.broadcast %370 : f32 to vector<16x128xf32>
    %372 = arith.mulf %371, %357 : vector<16x128xf32>
    %373 = arith.addf %340, %372 : vector<16x128xf32>
    %c84 = arith.constant 84 : index
    %374 = memref.load %arg3[%c84] : memref<128xf32, #tpu.memory_space<smem>>
    %375 = vector.broadcast %374 : f32 to vector<16x128xf32>
    %376 = arith.mulf %375, %357 : vector<16x128xf32>
    %377 = arith.addf %344, %376 : vector<16x128xf32>
    %c85 = arith.constant 85 : index
    %378 = memref.load %arg3[%c85] : memref<128xf32, #tpu.memory_space<smem>>
    %379 = vector.broadcast %378 : f32 to vector<16x128xf32>
    %380 = arith.mulf %379, %357 : vector<16x128xf32>
    %381 = arith.addf %348, %380 : vector<16x128xf32>
    %c86 = arith.constant 86 : index
    %382 = memref.load %arg3[%c86] : memref<128xf32, #tpu.memory_space<smem>>
    %383 = vector.broadcast %382 : f32 to vector<16x128xf32>
    %384 = arith.mulf %383, %357 : vector<16x128xf32>
    %385 = arith.addf %352, %384 : vector<16x128xf32>
    %c87 = arith.constant 87 : index
    %386 = memref.load %arg3[%c87] : memref<128xf32, #tpu.memory_space<smem>>
    %387 = vector.broadcast %386 : f32 to vector<16x128xf32>
    %388 = arith.mulf %387, %357 : vector<16x128xf32>
    %389 = arith.addf %356, %388 : vector<16x128xf32>
    %390 = vector.extract_strided_slice %10 {offsets = [32, 384], sizes = [16, 128], strides = [1, 1]} : vector<64x512xf32> to vector<16x128xf32>
    %c88 = arith.constant 88 : index
    %391 = memref.load %arg3[%c88] : memref<128xf32, #tpu.memory_space<smem>>
    %392 = vector.broadcast %391 : f32 to vector<16x128xf32>
    %393 = arith.mulf %392, %390 : vector<16x128xf32>
    %394 = arith.addf %361, %393 : vector<16x128xf32>
    %c89 = arith.constant 89 : index
    %395 = memref.load %arg3[%c89] : memref<128xf32, #tpu.memory_space<smem>>
    %396 = vector.broadcast %395 : f32 to vector<16x128xf32>
    %397 = arith.mulf %396, %390 : vector<16x128xf32>
    %398 = arith.addf %365, %397 : vector<16x128xf32>
    %c90 = arith.constant 90 : index
    %399 = memref.load %arg3[%c90] : memref<128xf32, #tpu.memory_space<smem>>
    %400 = vector.broadcast %399 : f32 to vector<16x128xf32>
    %401 = arith.mulf %400, %390 : vector<16x128xf32>
    %402 = arith.addf %369, %401 : vector<16x128xf32>
    %c91 = arith.constant 91 : index
    %403 = memref.load %arg3[%c91] : memref<128xf32, #tpu.memory_space<smem>>
    %404 = vector.broadcast %403 : f32 to vector<16x128xf32>
    %405 = arith.mulf %404, %390 : vector<16x128xf32>
    %406 = arith.addf %373, %405 : vector<16x128xf32>
    %c92 = arith.constant 92 : index
    %407 = memref.load %arg3[%c92] : memref<128xf32, #tpu.memory_space<smem>>
    %408 = vector.broadcast %407 : f32 to vector<16x128xf32>
    %409 = arith.mulf %408, %390 : vector<16x128xf32>
    %410 = arith.addf %377, %409 : vector<16x128xf32>
    %c93 = arith.constant 93 : index
    %411 = memref.load %arg3[%c93] : memref<128xf32, #tpu.memory_space<smem>>
    %412 = vector.broadcast %411 : f32 to vector<16x128xf32>
    %413 = arith.mulf %412, %390 : vector<16x128xf32>
    %414 = arith.addf %381, %413 : vector<16x128xf32>
    %c94 = arith.constant 94 : index
    %415 = memref.load %arg3[%c94] : memref<128xf32, #tpu.memory_space<smem>>
    %416 = vector.broadcast %415 : f32 to vector<16x128xf32>
    %417 = arith.mulf %416, %390 : vector<16x128xf32>
    %418 = arith.addf %385, %417 : vector<16x128xf32>
    %c95 = arith.constant 95 : index
    %419 = memref.load %arg3[%c95] : memref<128xf32, #tpu.memory_space<smem>>
    %420 = vector.broadcast %419 : f32 to vector<16x128xf32>
    %421 = arith.mulf %420, %390 : vector<16x128xf32>
    %422 = arith.addf %389, %421 : vector<16x128xf32>
    %423 = vector.extract_strided_slice %10 {offsets = [48, 0], sizes = [16, 128], strides = [1, 1]} : vector<64x512xf32> to vector<16x128xf32>
    %c96 = arith.constant 96 : index
    %424 = memref.load %arg3[%c96] : memref<128xf32, #tpu.memory_space<smem>>
    %425 = vector.broadcast %424 : f32 to vector<16x128xf32>
    %426 = arith.mulf %425, %423 : vector<16x128xf32>
    %427 = arith.addf %394, %426 : vector<16x128xf32>
    %c97 = arith.constant 97 : index
    %428 = memref.load %arg3[%c97] : memref<128xf32, #tpu.memory_space<smem>>
    %429 = vector.broadcast %428 : f32 to vector<16x128xf32>
    %430 = arith.mulf %429, %423 : vector<16x128xf32>
    %431 = arith.addf %398, %430 : vector<16x128xf32>
    %c98 = arith.constant 98 : index
    %432 = memref.load %arg3[%c98] : memref<128xf32, #tpu.memory_space<smem>>
    %433 = vector.broadcast %432 : f32 to vector<16x128xf32>
    %434 = arith.mulf %433, %423 : vector<16x128xf32>
    %435 = arith.addf %402, %434 : vector<16x128xf32>
    %c99 = arith.constant 99 : index
    %436 = memref.load %arg3[%c99] : memref<128xf32, #tpu.memory_space<smem>>
    %437 = vector.broadcast %436 : f32 to vector<16x128xf32>
    %438 = arith.mulf %437, %423 : vector<16x128xf32>
    %439 = arith.addf %406, %438 : vector<16x128xf32>
    %c100 = arith.constant 100 : index
    %440 = memref.load %arg3[%c100] : memref<128xf32, #tpu.memory_space<smem>>
    %441 = vector.broadcast %440 : f32 to vector<16x128xf32>
    %442 = arith.mulf %441, %423 : vector<16x128xf32>
    %443 = arith.addf %410, %442 : vector<16x128xf32>
    %c101 = arith.constant 101 : index
    %444 = memref.load %arg3[%c101] : memref<128xf32, #tpu.memory_space<smem>>
    %445 = vector.broadcast %444 : f32 to vector<16x128xf32>
    %446 = arith.mulf %445, %423 : vector<16x128xf32>
    %447 = arith.addf %414, %446 : vector<16x128xf32>
    %c102 = arith.constant 102 : index
    %448 = memref.load %arg3[%c102] : memref<128xf32, #tpu.memory_space<smem>>
    %449 = vector.broadcast %448 : f32 to vector<16x128xf32>
    %450 = arith.mulf %449, %423 : vector<16x128xf32>
    %451 = arith.addf %418, %450 : vector<16x128xf32>
    %c103 = arith.constant 103 : index
    %452 = memref.load %arg3[%c103] : memref<128xf32, #tpu.memory_space<smem>>
    %453 = vector.broadcast %452 : f32 to vector<16x128xf32>
    %454 = arith.mulf %453, %423 : vector<16x128xf32>
    %455 = arith.addf %422, %454 : vector<16x128xf32>
    %456 = vector.extract_strided_slice %10 {offsets = [48, 128], sizes = [16, 128], strides = [1, 1]} : vector<64x512xf32> to vector<16x128xf32>
    %c104 = arith.constant 104 : index
    %457 = memref.load %arg3[%c104] : memref<128xf32, #tpu.memory_space<smem>>
    %458 = vector.broadcast %457 : f32 to vector<16x128xf32>
    %459 = arith.mulf %458, %456 : vector<16x128xf32>
    %460 = arith.addf %427, %459 : vector<16x128xf32>
    %c105 = arith.constant 105 : index
    %461 = memref.load %arg3[%c105] : memref<128xf32, #tpu.memory_space<smem>>
    %462 = vector.broadcast %461 : f32 to vector<16x128xf32>
    %463 = arith.mulf %462, %456 : vector<16x128xf32>
    %464 = arith.addf %431, %463 : vector<16x128xf32>
    %c106 = arith.constant 106 : index
    %465 = memref.load %arg3[%c106] : memref<128xf32, #tpu.memory_space<smem>>
    %466 = vector.broadcast %465 : f32 to vector<16x128xf32>
    %467 = arith.mulf %466, %456 : vector<16x128xf32>
    %468 = arith.addf %435, %467 : vector<16x128xf32>
    %c107 = arith.constant 107 : index
    %469 = memref.load %arg3[%c107] : memref<128xf32, #tpu.memory_space<smem>>
    %470 = vector.broadcast %469 : f32 to vector<16x128xf32>
    %471 = arith.mulf %470, %456 : vector<16x128xf32>
    %472 = arith.addf %439, %471 : vector<16x128xf32>
    %c108 = arith.constant 108 : index
    %473 = memref.load %arg3[%c108] : memref<128xf32, #tpu.memory_space<smem>>
    %474 = vector.broadcast %473 : f32 to vector<16x128xf32>
    %475 = arith.mulf %474, %456 : vector<16x128xf32>
    %476 = arith.addf %443, %475 : vector<16x128xf32>
    %c109 = arith.constant 109 : index
    %477 = memref.load %arg3[%c109] : memref<128xf32, #tpu.memory_space<smem>>
    %478 = vector.broadcast %477 : f32 to vector<16x128xf32>
    %479 = arith.mulf %478, %456 : vector<16x128xf32>
    %480 = arith.addf %447, %479 : vector<16x128xf32>
    %c110 = arith.constant 110 : index
    %481 = memref.load %arg3[%c110] : memref<128xf32, #tpu.memory_space<smem>>
    %482 = vector.broadcast %481 : f32 to vector<16x128xf32>
    %483 = arith.mulf %482, %456 : vector<16x128xf32>
    %484 = arith.addf %451, %483 : vector<16x128xf32>
    %c111 = arith.constant 111 : index
    %485 = memref.load %arg3[%c111] : memref<128xf32, #tpu.memory_space<smem>>
    %486 = vector.broadcast %485 : f32 to vector<16x128xf32>
    %487 = arith.mulf %486, %456 : vector<16x128xf32>
    %488 = arith.addf %455, %487 : vector<16x128xf32>
    %489 = vector.extract_strided_slice %10 {offsets = [48, 256], sizes = [16, 128], strides = [1, 1]} : vector<64x512xf32> to vector<16x128xf32>
    %c112 = arith.constant 112 : index
    %490 = memref.load %arg3[%c112] : memref<128xf32, #tpu.memory_space<smem>>
    %491 = vector.broadcast %490 : f32 to vector<16x128xf32>
    %492 = arith.mulf %491, %489 : vector<16x128xf32>
    %493 = arith.addf %460, %492 : vector<16x128xf32>
    %c113 = arith.constant 113 : index
    %494 = memref.load %arg3[%c113] : memref<128xf32, #tpu.memory_space<smem>>
    %495 = vector.broadcast %494 : f32 to vector<16x128xf32>
    %496 = arith.mulf %495, %489 : vector<16x128xf32>
    %497 = arith.addf %464, %496 : vector<16x128xf32>
    %c114 = arith.constant 114 : index
    %498 = memref.load %arg3[%c114] : memref<128xf32, #tpu.memory_space<smem>>
    %499 = vector.broadcast %498 : f32 to vector<16x128xf32>
    %500 = arith.mulf %499, %489 : vector<16x128xf32>
    %501 = arith.addf %468, %500 : vector<16x128xf32>
    %c115 = arith.constant 115 : index
    %502 = memref.load %arg3[%c115] : memref<128xf32, #tpu.memory_space<smem>>
    %503 = vector.broadcast %502 : f32 to vector<16x128xf32>
    %504 = arith.mulf %503, %489 : vector<16x128xf32>
    %505 = arith.addf %472, %504 : vector<16x128xf32>
    %c116 = arith.constant 116 : index
    %506 = memref.load %arg3[%c116] : memref<128xf32, #tpu.memory_space<smem>>
    %507 = vector.broadcast %506 : f32 to vector<16x128xf32>
    %508 = arith.mulf %507, %489 : vector<16x128xf32>
    %509 = arith.addf %476, %508 : vector<16x128xf32>
    %c117 = arith.constant 117 : index
    %510 = memref.load %arg3[%c117] : memref<128xf32, #tpu.memory_space<smem>>
    %511 = vector.broadcast %510 : f32 to vector<16x128xf32>
    %512 = arith.mulf %511, %489 : vector<16x128xf32>
    %513 = arith.addf %480, %512 : vector<16x128xf32>
    %c118 = arith.constant 118 : index
    %514 = memref.load %arg3[%c118] : memref<128xf32, #tpu.memory_space<smem>>
    %515 = vector.broadcast %514 : f32 to vector<16x128xf32>
    %516 = arith.mulf %515, %489 : vector<16x128xf32>
    %517 = arith.addf %484, %516 : vector<16x128xf32>
    %c119 = arith.constant 119 : index
    %518 = memref.load %arg3[%c119] : memref<128xf32, #tpu.memory_space<smem>>
    %519 = vector.broadcast %518 : f32 to vector<16x128xf32>
    %520 = arith.mulf %519, %489 : vector<16x128xf32>
    %521 = arith.addf %488, %520 : vector<16x128xf32>
    %522 = vector.extract_strided_slice %10 {offsets = [48, 384], sizes = [16, 128], strides = [1, 1]} : vector<64x512xf32> to vector<16x128xf32>
    %c120 = arith.constant 120 : index
    %523 = memref.load %arg3[%c120] : memref<128xf32, #tpu.memory_space<smem>>
    %524 = vector.broadcast %523 : f32 to vector<16x128xf32>
    %525 = arith.mulf %524, %522 : vector<16x128xf32>
    %526 = arith.addf %493, %525 : vector<16x128xf32>
    %c121 = arith.constant 121 : index
    %527 = memref.load %arg3[%c121] : memref<128xf32, #tpu.memory_space<smem>>
    %528 = vector.broadcast %527 : f32 to vector<16x128xf32>
    %529 = arith.mulf %528, %522 : vector<16x128xf32>
    %530 = arith.addf %497, %529 : vector<16x128xf32>
    %c122 = arith.constant 122 : index
    %531 = memref.load %arg3[%c122] : memref<128xf32, #tpu.memory_space<smem>>
    %532 = vector.broadcast %531 : f32 to vector<16x128xf32>
    %533 = arith.mulf %532, %522 : vector<16x128xf32>
    %534 = arith.addf %501, %533 : vector<16x128xf32>
    %c123 = arith.constant 123 : index
    %535 = memref.load %arg3[%c123] : memref<128xf32, #tpu.memory_space<smem>>
    %536 = vector.broadcast %535 : f32 to vector<16x128xf32>
    %537 = arith.mulf %536, %522 : vector<16x128xf32>
    %538 = arith.addf %505, %537 : vector<16x128xf32>
    %c124 = arith.constant 124 : index
    %539 = memref.load %arg3[%c124] : memref<128xf32, #tpu.memory_space<smem>>
    %540 = vector.broadcast %539 : f32 to vector<16x128xf32>
    %541 = arith.mulf %540, %522 : vector<16x128xf32>
    %542 = arith.addf %509, %541 : vector<16x128xf32>
    %c125 = arith.constant 125 : index
    %543 = memref.load %arg3[%c125] : memref<128xf32, #tpu.memory_space<smem>>
    %544 = vector.broadcast %543 : f32 to vector<16x128xf32>
    %545 = arith.mulf %544, %522 : vector<16x128xf32>
    %546 = arith.addf %513, %545 : vector<16x128xf32>
    %c126 = arith.constant 126 : index
    %547 = memref.load %arg3[%c126] : memref<128xf32, #tpu.memory_space<smem>>
    %548 = vector.broadcast %547 : f32 to vector<16x128xf32>
    %549 = arith.mulf %548, %522 : vector<16x128xf32>
    %550 = arith.addf %517, %549 : vector<16x128xf32>
    %c127 = arith.constant 127 : index
    %551 = memref.load %arg3[%c127] : memref<128xf32, #tpu.memory_space<smem>>
    %552 = vector.broadcast %551 : f32 to vector<16x128xf32>
    %553 = arith.mulf %552, %522 : vector<16x128xf32>
    %554 = arith.addf %521, %553 : vector<16x128xf32>
    %c0_22 = arith.constant 0 : index
    %c0_23 = arith.constant 0 : index
    %c0_24 = arith.constant 0 : index
    %555 = vector.load %arg5[%c0_22, %c0_23, %c0_24] : memref<8x16x128xf32, #tpu.memory_space<vmem>>, vector<1x16x128xf32>
    %556 = vector.shape_cast %555 : vector<1x16x128xf32> to vector<16x128xf32>
    %557 = vector.shape_cast %526 : vector<16x128xf32> to vector<1x16x128xf32>
    tpu.vector_store %arg5[%c0_22, %c0_23, %c0_24], %557 {strides = array<i32>} : memref<8x16x128xf32, #tpu.memory_space<vmem>>, vector<1x16x128xf32>,
    %c1_25 = arith.constant 1 : index
    %c0_26 = arith.constant 0 : index
    %c0_27 = arith.constant 0 : index
    %558 = vector.load %arg5[%c1_25, %c0_26, %c0_27] : memref<8x16x128xf32, #tpu.memory_space<vmem>>, vector<1x16x128xf32>
    %559 = vector.shape_cast %558 : vector<1x16x128xf32> to vector<16x128xf32>
    %560 = vector.shape_cast %530 : vector<16x128xf32> to vector<1x16x128xf32>
    tpu.vector_store %arg5[%c1_25, %c0_26, %c0_27], %560 {strides = array<i32>} : memref<8x16x128xf32, #tpu.memory_space<vmem>>, vector<1x16x128xf32>,
    %c2_28 = arith.constant 2 : index
    %c0_29 = arith.constant 0 : index
    %c0_30 = arith.constant 0 : index
    %561 = vector.load %arg5[%c2_28, %c0_29, %c0_30] : memref<8x16x128xf32, #tpu.memory_space<vmem>>, vector<1x16x128xf32>
    %562 = vector.shape_cast %561 : vector<1x16x128xf32> to vector<16x128xf32>
    %563 = vector.shape_cast %534 : vector<16x128xf32> to vector<1x16x128xf32>
    tpu.vector_store %arg5[%c2_28, %c0_29, %c0_30], %563 {strides = array<i32>} : memref<8x16x128xf32, #tpu.memory_space<vmem>>, vector<1x16x128xf32>,
    %c3_31 = arith.constant 3 : index
    %c0_32 = arith.constant 0 : index
    %c0_33 = arith.constant 0 : index
    %564 = vector.load %arg5[%c3_31, %c0_32, %c0_33] : memref<8x16x128xf32, #tpu.memory_space<vmem>>, vector<1x16x128xf32>
    %565 = vector.shape_cast %564 : vector<1x16x128xf32> to vector<16x128xf32>
    %566 = vector.shape_cast %538 : vector<16x128xf32> to vector<1x16x128xf32>
    tpu.vector_store %arg5[%c3_31, %c0_32, %c0_33], %566 {strides = array<i32>} : memref<8x16x128xf32, #tpu.memory_space<vmem>>, vector<1x16x128xf32>,
    %c4_34 = arith.constant 4 : index
    %c0_35 = arith.constant 0 : index
    %c0_36 = arith.constant 0 : index
    %567 = vector.load %arg5[%c4_34, %c0_35, %c0_36] : memref<8x16x128xf32, #tpu.memory_space<vmem>>, vector<1x16x128xf32>
    %568 = vector.shape_cast %567 : vector<1x16x128xf32> to vector<16x128xf32>
    %569 = vector.shape_cast %542 : vector<16x128xf32> to vector<1x16x128xf32>
    tpu.vector_store %arg5[%c4_34, %c0_35, %c0_36], %569 {strides = array<i32>} : memref<8x16x128xf32, #tpu.memory_space<vmem>>, vector<1x16x128xf32>,
    %c5_37 = arith.constant 5 : index
    %c0_38 = arith.constant 0 : index
    %c0_39 = arith.constant 0 : index
    %570 = vector.load %arg5[%c5_37, %c0_38, %c0_39] : memref<8x16x128xf32, #tpu.memory_space<vmem>>, vector<1x16x128xf32>
    %571 = vector.shape_cast %570 : vector<1x16x128xf32> to vector<16x128xf32>
    %572 = vector.shape_cast %546 : vector<16x128xf32> to vector<1x16x128xf32>
    tpu.vector_store %arg5[%c5_37, %c0_38, %c0_39], %572 {strides = array<i32>} : memref<8x16x128xf32, #tpu.memory_space<vmem>>, vector<1x16x128xf32>,
    %c6_40 = arith.constant 6 : index
    %c0_41 = arith.constant 0 : index
    %c0_42 = arith.constant 0 : index
    %573 = vector.load %arg5[%c6_40, %c0_41, %c0_42] : memref<8x16x128xf32, #tpu.memory_space<vmem>>, vector<1x16x128xf32>
    %574 = vector.shape_cast %573 : vector<1x16x128xf32> to vector<16x128xf32>
    %575 = vector.shape_cast %550 : vector<16x128xf32> to vector<1x16x128xf32>
    tpu.vector_store %arg5[%c6_40, %c0_41, %c0_42], %575 {strides = array<i32>} : memref<8x16x128xf32, #tpu.memory_space<vmem>>, vector<1x16x128xf32>,
    %c7_43 = arith.constant 7 : index
    %c0_44 = arith.constant 0 : index
    %c0_45 = arith.constant 0 : index
    %576 = vector.load %arg5[%c7_43, %c0_44, %c0_45] : memref<8x16x128xf32, #tpu.memory_space<vmem>>, vector<1x16x128xf32>
    %577 = vector.shape_cast %576 : vector<1x16x128xf32> to vector<16x128xf32>
    %578 = vector.shape_cast %554 : vector<16x128xf32> to vector<1x16x128xf32>
    tpu.vector_store %arg5[%c7_43, %c0_44, %c0_45], %578 {strides = array<i32>} : memref<8x16x128xf32, #tpu.memory_space<vmem>>, vector<1x16x128xf32>,
    return
  }
  func.func @transform_0(%arg0: i32) -> (i32, i32, i32) {
    %c0_i32 = arith.constant 0 : i32
    %c0_i32_0 = arith.constant 0 : i32
    %c0_i32_1 = arith.constant 0 : i32
    return %c0_i32, %c0_i32_0, %arg0 : i32, i32, i32
  }
  func.func @transform_1(%arg0: i32) -> (i32, i32) {
    %c0_i32 = arith.constant 0 : i32
    %c0_i32_0 = arith.constant 0 : i32
    %c0_i32_1 = arith.constant 0 : i32
    return %c0_i32, %c0_i32_0 : i32, i32
  }
  func.func @transform_2(%arg0: i32) -> i32 {
    %c0_i32 = arith.constant 0 : i32
    %c0_i32_0 = arith.constant 0 : i32
    return %c0_i32 : i32
  }
  func.func @transform_3(%arg0: i32) -> i32 {
    %c0_i32 = arith.constant 0 : i32
    %c0_i32_0 = arith.constant 0 : i32
    return %c0_i32 : i32
  }
  func.func @transform_4(%arg0: i32) -> (i32, i32, i32) {
    %c0_i32 = arith.constant 0 : i32
    %c0_i32_0 = arith.constant 0 : i32
    %c0_i32_1 = arith.constant 0 : i32
    return %c0_i32, %c0_i32_0, %arg0 : i32, i32, i32
  }
}

</mosaic_0001>

<llo_original>
// kernel: _spatial_conv_jit.1
$region0: #{_spatial_conv_jit.1}
  #allocation0 [shape = 'u32[]', space=smem, size = 0x4, offset = 0x4, fixed_abs, tag = 'smem constant byte address 0x4 - core index']
  #allocation1 [shape = 'u32[144,128]{1,0:T(1,128)}', space=vmem, size = 0x12000, scoped, tag = 'internal scratch']
  %s0 = inlined_call_operand.vmem [shape: bf16[4,16,256], index: 0, kind: input, shape index: {}]
  %s1 = inlined_call_operand.vmem [shape: bf16[64,16], index: 1, kind: input, shape index: {}]
  %s2 = inlined_call_operand.vmem [shape: f32[128], index: 2, kind: input, shape index: {}]
  %s3 = inlined_call_operand.vmem [shape: f32[8], index: 3, kind: input, shape index: {}]
  %s4 = inlined_call_operand.vmem [shape: f32[8,16,256], index: 4, kind: output, shape index: {}]
  %s5 = sld [smem:[#allocation0]]
  $region132: #{_spatial_conv_jit.1} parent=0
    _
  %s7 = ssub.s32 1, %s5
  %s8 = scalar_select 0, %s7, %s5
  $region1: #{_spatial_conv_jit.1} parent=0
    #allocation2 [shape = 'u8[32768]{0}', space=vmem, size = 0x8000, scoped, tag = 'input window, operand 0']
    #allocation3 [shape = 'u8[512]{0}', space=smem, size = 0x200, scoped, tag = 'input window, operand 2, single buffered']
    #allocation4 [shape = 's32[2]{0}', space=sflag, size = 0x8, scoped, tag = 'scoped memory for _spatial_conv_jit.1']
    #allocation5 [shape = 'u8[512]{0}', space=smem, size = 0x200, scoped, tag = 'input window, operand 3, single buffered']
    #allocation6 [shape = 's32[1]{0}', space=sflag, size = 0x4, scoped, tag = 'scoped memory for _spatial_conv_jit.1']
    #allocation7 [shape = 'u8[131072]{0}', space=vmem, size = 0x20000, scoped, tag = 'output window, operand 0']
    %9 = vsyncpa [#allocation4], 0
    %10 = vsyncpa [#allocation6], 0
    loop: start=0, step=1, limit=4
    $region2: #{_spatial_conv_jit.1} parent=1 // loop_pre_header
      _
    $region3: #{_spatial_conv_jit.1} parent=1 // loop_header
      %s12 = sphi 0, %s16
      %p13 = scmp.ge.s32.totalorder %s12, 4
      %s22 = sphi 0, %s24
      %s25 = sphi 0, %s22
      %s26 = sphi 0, %s25
      %s42 = sphi 0, %s26
      %s46 = sphi 0, %s46
      %s48 = sphi 0, %s46
      %s49 = sphi 0, %s48
      %s63 = sphi 0, %s49
      %s67 = sphi 0, %s67
      %s69 = sphi 0, %s67
      %s70 = sphi 0, %s69
      %s84 = sphi 0, %s70
      %s88 = sphi 0, %s88
      %s90 = sphi 0, %s88
      %s91 = sphi 0, %s90
      %s105 = sphi 0, %s91
      %s111 = sphi 0, %s113
      %s114 = sphi 0, %s111
      %s115 = sphi 0, %s114
      %s131 = sphi 0, %s115
    $region4: #{_spatial_conv_jit.1} parent=1 // loop_header_branch
      %15 = sbr.rel (%p13) target = $region8
    $region5: #{_spatial_conv_jit.1} parent=1 // loop_body
      %s17 = ssub.s32 %s12, 1
      %s18 = ssub.s32 %s12, 2
      %s19 = sadd.s32 %s12, 1
      %s20 = ssub.s32 %s12, %s19
      %p21 = scmp.eq.s32.totalorder %s20, 0
      %s23 = sadd.s32 %s22, 1
      %s24 = scalar_select %p21, %s22, %s23
      %p27 = pneg %p21
      %p28 = scmp.eq.s32.totalorder %s12, 1
      %p29 = por %p27, %p28
      %p30 = scmp.ne.s32.totalorder %s22, %s25
      %p31 = scmp.eq.s32.totalorder %s12, 0
      %p32 = por %p30, %p31
      %p33 = scmp.ne.s32.totalorder %s22, %s25
      %p34 = scmp.eq.s32.totalorder %s17, 1
      %p35 = por %p33, %p34
      %p36 = scmp.ne.s32.totalorder %s25, %s26
      %p37 = scmp.eq.s32.totalorder %s17, 0
      %p38 = por %p36, %p37
      %p39 = scmp.ne.s32.totalorder %s25, %s26
      %p40 = scmp.eq.s32.totalorder %s18, 1
      %p41 = por %p39, %p40
      %p43 = scmp.ne.s32.totalorder %s26, %s42
      %p44 = scmp.eq.s32.totalorder %s18, 0
      %p45 = por %p43, %p44
      %s47 = sadd.s32 %s46, 1
      %p50 = scmp.eq.s32.totalorder %s12, 1
      %p51 = scmp.ne.s32.totalorder %s46, %s48
      %p52 = scmp.eq.s32.totalorder %s12, 0
      %p53 = por %p51, %p52
      %p54 = scmp.ne.s32.totalorder %s46, %s48
      %p55 = scmp.eq.s32.totalorder %s17, 1
      %p56 = por %p54, %p55
      %p57 = scmp.ne.s32.totalorder %s48, %s49
      %p58 = scmp.eq.s32.totalorder %s17, 0
      %p59 = por %p57, %p58
      %p60 = scmp.ne.s32.totalorder %s48, %s49
      %p61 = scmp.eq.s32.totalorder %s18, 1
      %p62 = por %p60, %p61
      %p64 = scmp.ne.s32.totalorder %s49, %s63
      %p65 = scmp.eq.s32.totalorder %s18, 0
      %p66 = por %p64, %p65
      %s68 = sadd.s32 %s67, 1
      %p71 = scmp.eq.s32.totalorder %s12, 1
      %p72 = scmp.ne.s32.totalorder %s67, %s69
      %p73 = scmp.eq.s32.totalorder %s12, 0
      %p74 = por %p72, %p73
      %p75 = scmp.ne.s32.totalorder %s67, %s69
      %p76 = scmp.eq.s32.totalorder %s17, 1
      %p77 = por %p75, %p76
      %p78 = scmp.ne.s32.totalorder %s69, %s70
      %p79 = scmp.eq.s32.totalorder %s17, 0
      %p80 = por %p78, %p79
      %p81 = scmp.ne.s32.totalorder %s69, %s70
      %p82 = scmp.eq.s32.totalorder %s18, 1
      %p83 = por %p81, %p82
      %p85 = scmp.ne.s32.totalorder %s70, %s84
      %p86 = scmp.eq.s32.totalorder %s18, 0
      %p87 = por %p85, %p86
      %s89 = sadd.s32 %s88, 1
      %p92 = scmp.eq.s32.totalorder %s12, 1
      %p93 = scmp.ne.s32.totalorder %s88, %s90
      %p94 = scmp.eq.s32.totalorder %s12, 0
      %p95 = por %p93, %p94
      %p96 = scmp.ne.s32.totalorder %s88, %s90
      %p97 = scmp.eq.s32.totalorder %s17, 1
      %p98 = por %p96, %p97
      %p99 = scmp.ne.s32.totalorder %s90, %s91
      %p100 = scmp.eq.s32.totalorder %s17, 0
      %p101 = por %p99, %p100
      %p102 = scmp.ne.s32.totalorder %s90, %s91
      %p103 = scmp.eq.s32.totalorder %s18, 1
      %p104 = por %p102, %p103
      %p106 = scmp.ne.s32.totalorder %s91, %s105
      %p107 = scmp.eq.s32.totalorder %s18, 0
      %p108 = por %p106, %p107
      %s109 = ssub.s32 %s12, %s19
      %p110 = scmp.eq.s32.totalorder %s109, 0
      %s112 = sadd.s32 %s111, 1
      %s113 = scalar_select %p110, %s111, %s112
      %p116 = pneg %p110
      %p117 = scmp.eq.s32.totalorder %s12, 1
      %p118 = por %p116, %p117
      %p119 = scmp.ne.s32.totalorder %s111, %s114
      %p120 = scmp.eq.s32.totalorder %s12, 0
      %p121 = por %p119, %p120
      %p122 = scmp.ne.s32.totalorder %s111, %s114
      %p123 = scmp.eq.s32.totalorder %s17, 1
      %p124 = por %p122, %p123
      %p125 = scmp.ne.s32.totalorder %s114, %s115
      %p126 = scmp.eq.s32.totalorder %s17, 0
      %p127 = por %p125, %p126
      %p128 = scmp.ne.s32.totalorder %s114, %s115
      %p129 = scmp.eq.s32.totalorder %s18, 1
      %p130 = por %p128, %p129
      %p132 = scmp.ne.s32.totalorder %s115, %s131
      %p133 = scmp.eq.s32.totalorder %s18, 0
      %p134 = por %p132, %p133
      %p135 = scmp.le.s32.totalorder 1, %s12
      %p136 = scmp.lt.s32.totalorder %s12, 3
      %p137 = pnand %p135, %p136
      %p138 = pneg %p137
      // Predicated region
      $region9: #{_spatial_conv_jit.1} parent=5 // pred_check
        _
      $region10: #{_spatial_conv_jit.1} parent=5 // pred_check_branch
        %140 = sbr.rel (%p137) target = $region12
      $region11: #{_spatial_conv_jit.1} parent=5 // pred_region
        %s141 = ssub.s32 %s12, 1
        // Predicated region
        $region13: #{_spatial_conv_jit.1} parent=11 // pred_check
          %p142 = pneg %p59
        $region14: #{_spatial_conv_jit.1} parent=11 // pred_check_branch
          %144 = sbr.rel (%p142) target = $region16
        $region15: #{_spatial_conv_jit.1} parent=11 // pred_region
          _
        $region16: #{_spatial_conv_jit.1} parent=11 // pred_fallthru
          _
        // Predicated region
        $region17: #{_spatial_conv_jit.1} parent=11 // pred_check
          %p145 = pneg %p80
        $region18: #{_spatial_conv_jit.1} parent=11 // pred_check_branch
          %147 = sbr.rel (%p145) target = $region20
        $region19: #{_spatial_conv_jit.1} parent=11 // pred_region
          %s149 = ssub.s32 16, 16
          %150 = vsyncadd [#allocation4], %s149
          %s152 = sshll.u32 %s2, 4
          %s153 = int_to_ptr.vmem [resolvable:$true] %s152
          %155 = dma.vmem_to_smem %s153, 16, [#allocation3], [#allocation4]
        $region20: #{_spatial_conv_jit.1} parent=11 // pred_fallthru
          _
        // Predicated region
        $region21: #{_spatial_conv_jit.1} parent=11 // pred_check
          %p156 = pneg %p101
        $region22: #{_spatial_conv_jit.1} parent=11 // pred_check_branch
          %158 = sbr.rel (%p156) target = $region24
        $region23: #{_spatial_conv_jit.1} parent=11 // pred_region
          %s160 = ssub.s32 16, 16
          %161 = vsyncadd [#allocation6], %s160
          %s163 = sshll.u32 %s3, 4
          %s164 = int_to_ptr.vmem [resolvable:$true] %s163
          %166 = dma.vmem_to_smem %s164, 16, [#allocation5], [#allocation6]
        $region24: #{_spatial_conv_jit.1} parent=11 // pred_fallthru
          _
      $region12: #{_spatial_conv_jit.1} parent=5 // pred_fallthru
        _
      %p167 = scmp.lt.s32.totalorder %s12, 2
      // Predicated region
      $region25: #{_spatial_conv_jit.1} parent=5 // pred_check
        %p168 = pneg %p167
      $region26: #{_spatial_conv_jit.1} parent=5 // pred_check_branch
        %170 = sbr.rel (%p168) target = $region28
      $region27: #{_spatial_conv_jit.1} parent=5 // pred_region
        // Predicated region
        $region29: #{_spatial_conv_jit.1} parent=27 // pred_check
          %p171 = pneg %p32
        $region30: #{_spatial_conv_jit.1} parent=27 // pred_check_branch
          %173 = sbr.rel (%p171) target = $region32
        $region31: #{_spatial_conv_jit.1} parent=27 // pred_region
          %s174 = sand.u32 %s22, 1
          %s175 = sand.u32 %s22, 1
          %s176 = smul.addr %s175, 32
          %s177 = scalar_lea.vmem [#allocation2], %s176
          %s178 = smul.addr %s12, 4
          %s179 = scalar_lea.vmem %s0, %s178
          // Predicated region
          $region33: #{_spatial_conv_jit.1} parent=31 // pred_check
            _
          $region34: #{_spatial_conv_jit.1} parent=31 // pred_check_branch
            %181 = sbr.rel (0) target = $region36
          $region35: #{_spatial_conv_jit.1} parent=31 // pred_region
            // Predicated region
            $region37: #{_spatial_conv_jit.1} parent=35 // pred_check
              _
            $region38: #{_spatial_conv_jit.1} parent=35 // pred_check_branch
              %183 = sbr.rel target = $region40
            $region39: #{_spatial_conv_jit.1} parent=35 // pred_region
              // Predicated region
              $region52: #{_spatial_conv_jit.1} parent=39 // pred_check
                _
              $region53: #{_spatial_conv_jit.1} parent=39 // pred_check_branch
                %212 = sbr.rel (0) target = $region55
              $region54: #{_spatial_conv_jit.1} parent=39 // pred_region
                loop: start=0, step=1, limit=1
                $region56: #{_spatial_conv_jit.1} parent=54 // loop_pre_header
                  _
                $region57: #{_spatial_conv_jit.1} parent=54 // loop_header
                  %s214 = sphi 0, %s218
                  %p215 = scmp.ge.s32.totalorder %s214, 1
                  %s219 = sphi %s179, %s179
                  %s220 = sphi %s177, %s177
                $region58: #{_spatial_conv_jit.1} parent=54 // loop_header_branch
                  %217 = sbr.rel (%p215) target = $region62
                $region59: #{_spatial_conv_jit.1} parent=54 // loop_body
                  _
                $region60: #{_spatial_conv_jit.1} parent=54 // loop_footer
                  %s218 = sadd.s32 1, %s214
                $region61: #{_spatial_conv_jit.1} parent=54 // loop_footer_branch
                  %213 = sbr.rel target = $region57
                $region62: #{_spatial_conv_jit.1} parent=54 // loop_exit
                  _
                loop: start=0, step=1, limit=1
                $region63: #{_spatial_conv_jit.1} parent=54 // loop_pre_header
                  _
                $region64: #{_spatial_conv_jit.1} parent=54 // loop_header
                  %s223 = sphi 0, %s227
                  %p224 = scmp.ge.s32.totalorder %s223, 1
                  %s228 = sphi %s179, %s179
                  %s229 = sphi %s177, %s177
                $region65: #{_spatial_conv_jit.1} parent=54 // loop_header_branch
                  %226 = sbr.rel (%p224) target = $region69
                $region66: #{_spatial_conv_jit.1} parent=54 // loop_body
                  %v230 = vld [vmem:[%s228] sm:$0xf]
                  %231 = vst [vmem:[%s229] sm:$0xf] %v230
                  %v232 = vld [vmem:[%s228 + $0x8] sm:$0xf]
                  %233 = vst [vmem:[%s229 + $0x4] sm:$0xf] %v232
                  %v234 = vld [vmem:[%s228 + $0x10] sm:$0xf]
                  %235 = vst [vmem:[%s229 + $0x8] sm:$0xf] %v234
                  %v236 = vld [vmem:[%s228 + $0x18] sm:$0xf]
                  %237 = vst [vmem:[%s229 + $0xc] sm:$0xf] %v236
                  %v238 = vld [vmem:[%s228 + $0x20] sm:$0xf]
                  %239 = vst [vmem:[%s229 + $0x10] sm:$0xf] %v238
                  %v240 = vld [vmem:[%s228 + $0x28] sm:$0xf]
                  %241 = vst [vmem:[%s229 + $0x14] sm:$0xf] %v240
                  %v242 = vld [vmem:[%s228 + $0x30] sm:$0xf]
                  %243 = vst [vmem:[%s229 + $0x18] sm:$0xf] %v242
                  %v244 = vld [vmem:[%s228 + $0x38] sm:$0xf]
                  %245 = vst [vmem:[%s229 + $0x1c] sm:$0xf] %v244
                $region67: #{_spatial_conv_jit.1} parent=54 // loop_footer
                  %s227 = sadd.s32 1, %s223
                $region68: #{_spatial_conv_jit.1} parent=54 // loop_footer_branch
                  %222 = sbr.rel target = $region64
                $region69: #{_spatial_conv_jit.1} parent=54 // loop_exit
                  _
              $region55: #{_spatial_conv_jit.1} parent=39 // pred_fallthru
                _
            $region40: #{_spatial_conv_jit.1} parent=35 // pred_fallthru
              _
            // Predicated region
            $region41: #{_spatial_conv_jit.1} parent=35 // pred_check
              _
            $region42: #{_spatial_conv_jit.1} parent=35 // pred_check_branch
              %185 = sbr.rel (0) target = $region44
            $region43: #{_spatial_conv_jit.1} parent=35 // pred_region
              loop: start=0, step=1, limit=1
              $region45: #{_spatial_conv_jit.1} parent=43 // loop_pre_header
                _
              $region46: #{_spatial_conv_jit.1} parent=43 // loop_header
                %s188 = sphi 0, %s192
                %p189 = scmp.ge.s32.totalorder %s188, 1
                %s193 = sphi %s179, %s179
                %s194 = sphi %s177, %s177
              $region47: #{_spatial_conv_jit.1} parent=43 // loop_header_branch
                %191 = sbr.rel (%p189) target = $region51
              $region48: #{_spatial_conv_jit.1} parent=43 // loop_body
                %v195 = vld [vmem:[%s193] sm:$0xf]
                %196 = vst [vmem:[%s194] sm:$0xf] %v195
                %v197 = vld [vmem:[%s193 + $0x8] sm:$0xf]
                %198 = vst [vmem:[%s194 + $0x4] sm:$0xf] %v197
                %v199 = vld [vmem:[%s193 + $0x10] sm:$0xf]
                %200 = vst [vmem:[%s194 + $0x8] sm:$0xf] %v199
                %v201 = vld [vmem:[%s193 + $0x18] sm:$0xf]
                %202 = vst [vmem:[%s194 + $0xc] sm:$0xf] %v201
                %v203 = vld [vmem:[%s193 + $0x20] sm:$0xf]
                %204 = vst [vmem:[%s194 + $0x10] sm:$0xf] %v203
                %v205 = vld [vmem:[%s193 + $0x28] sm:$0xf]
                %206 = vst [vmem:[%s194 + $0x14] sm:$0xf] %v205
                %v207 = vld [vmem:[%s193 + $0x30] sm:$0xf]
                %208 = vst [vmem:[%s194 + $0x18] sm:$0xf] %v207
                %v209 = vld [vmem:[%s193 + $0x38] sm:$0xf]
                %210 = vst [vmem:[%s194 + $0x1c] sm:$0xf] %v209
              $region49: #{_spatial_conv_jit.1} parent=43 // loop_footer
                %s192 = sadd.s32 1, %s188
              $region50: #{_spatial_conv_jit.1} parent=43 // loop_footer_branch
                %187 = sbr.rel target = $region46
              $region51: #{_spatial_conv_jit.1} parent=43 // loop_exit
                _
            $region44: #{_spatial_conv_jit.1} parent=35 // pred_fallthru
              _
          $region36: #{_spatial_conv_jit.1} parent=31 // pred_fallthru
            _
          %246 = vnop
        $region32: #{_spatial_conv_jit.1} parent=27 // pred_fallthru
          _
      $region28: #{_spatial_conv_jit.1} parent=5 // pred_fallthru
        _
      %p247 = scmp.le.s32.totalorder 1, %s12
      %p248 = scmp.lt.s32.totalorder %s12, 3
      %p249 = pnand %p247, %p248
      %p250 = pneg %p249
      // Predicated region
      $region70: #{_spatial_conv_jit.1} parent=5 // pred_check
        _
      $region71: #{_spatial_conv_jit.1} parent=5 // pred_check_branch
        %252 = sbr.rel (%p249) target = $region73
      $region72: #{_spatial_conv_jit.1} parent=5 // pred_region
        %s253 = ssub.s32 %s12, 1
        %s254 = sand.u32 %s25, 1
        %s255 = sand.u32 %s25, 1
        %s256 = smul.addr %s255, 32
        %s257 = scalar_lea.vmem [#allocation2], %s256
        // Predicated region
        $region74: #{_spatial_conv_jit.1} parent=72 // pred_check
          %p258 = pneg %p38
        $region75: #{_spatial_conv_jit.1} parent=72 // pred_check_branch
          %260 = sbr.rel (%p258) target = $region77
        $region76: #{_spatial_conv_jit.1} parent=72 // pred_region
          _
        $region77: #{_spatial_conv_jit.1} parent=72 // pred_fallthru
          _
        // Predicated region
        $region78: #{_spatial_conv_jit.1} parent=72 // pred_check
          %p261 = pneg %p80
        $region79: #{_spatial_conv_jit.1} parent=72 // pred_check_branch
          %263 = sbr.rel (%p261) target = $region81
        $region80: #{_spatial_conv_jit.1} parent=72 // pred_region
          %264 = dma.done [#allocation4], 16
        $region81: #{_spatial_conv_jit.1} parent=72 // pred_fallthru
          _
        // Predicated region
        $region82: #{_spatial_conv_jit.1} parent=72 // pred_check
          %p265 = pneg %p101
        $region83: #{_spatial_conv_jit.1} parent=72 // pred_check_branch
          %267 = sbr.rel (%p265) target = $region85
        $region84: #{_spatial_conv_jit.1} parent=72 // pred_region
          %268 = dma.done [#allocation6], 16
        $region85: #{_spatial_conv_jit.1} parent=72 // pred_fallthru
          _
        %269 = sfence
        %s270 = sand.u32 %s25, 1
        %s271 = sand.u32 %s25, 1
        %s272 = smul.addr %s271, 32
        %s273 = scalar_lea.vmem [#allocation2], %s272
        %p274 = pneg %p38
        %p275 = pneg %p35
        %p276 = pneg %p59
        %p277 = pneg %p56
        %p278 = pneg %p80
        %p279 = pneg %p77
        %p280 = pneg %p101
        %p281 = pneg %p98
        %p282 = pneg %p127
        %p283 = pneg %p124
        %s284 = sand.u32 %s114, 1
        %s285 = sand.u32 %s114, 1
        %s286 = smul.addr %s285, 128
        %s287 = scalar_lea.vmem [#allocation7], %s286
        %v289 = vld [vmem:[%s257] sm:$0xf]
        %v290 = vld [vmem:[%s257 + $0x4] sm:$0xf]
        %s291 = scalar_lea.vmem %s257, 8 [#allocation2]
        %v292 = vld [vmem:[%s291] sm:$0xf]
        %v293 = vld [vmem:[%s291 + $0x4] sm:$0xf]
        %s294 = scalar_lea.vmem %s257, 16 [#allocation2]
        %v295 = vld [vmem:[%s294] sm:$0xf]
        %v296 = vld [vmem:[%s294 + $0x4] sm:$0xf]
        %s297 = scalar_lea.vmem %s257, 24 [#allocation2]
        %v298 = vld [vmem:[%s297] sm:$0xf]
        %v299 = vld [vmem:[%s297 + $0x4] sm:$0xf]
        %v302 = vunpack.c.l.b16 %v289
        %v303 = vunpack.c.l.b16 %v290
        %v304 = vpack.c.b16 %v303, %v302
        %v308 = vunpack.c.l.b16 %v292
        %v309 = vunpack.c.l.b16 %v293
        %v310 = vpack.c.b16 %v309, %v308
        %v314 = vunpack.c.l.b16 %v295
        %v315 = vunpack.c.l.b16 %v296
        %v316 = vpack.c.b16 %v315, %v314
        %v320 = vunpack.c.l.b16 %v298
        %v321 = vunpack.c.l.b16 %v299
        %v322 = vpack.c.b16 %v321, %v320
        %v324 = vld [vmem:[%s1] sm:$0xf]
        %v325 = vld [vmem:[%s1 + $0x4] sm:$0xf]
        %v326 = vld [vmem:[%s1 + $0x8] sm:$0xf]
        %v327 = vld [vmem:[%s1 + $0xc] sm:$0xf]
        %v328 = vld [vmem:[%s1 + $0x10] sm:$0xf]
        %v329 = vld [vmem:[%s1 + $0x14] sm:$0xf]
        %v330 = vld [vmem:[%s1 + $0x18] sm:$0xf]
        %v331 = vld [vmem:[%s1 + $0x1c] sm:$0xf]
        %v340 = vunpack.c.l.b16 %v324
        %v341 = vunpack.c.l.b16 %v325
        %v342 = vunpack.c.l.b16 %v326
        %v343 = vunpack.c.l.b16 %v327
        %v344 = vunpack.c.l.b16 %v328
        %v345 = vunpack.c.l.b16 %v329
        %v346 = vunpack.c.l.b16 %v330
        %v347 = vunpack.c.l.b16 %v331
        %v348 = vpack.c.b16 %v341, %v340
        %v349 = vpack.c.b16 %v343, %v342
        %v350 = vpack.c.b16 %v345, %v344
        %v351 = vpack.c.b16 %v347, %v346
        %vm352 = vcmask 130048
        %v354 = vsel %vm352, %v348, 0
        %v357 = vsel %vm352, %v349, 0
        %v360 = vsel %vm352, %v350, 0
        %v363 = vsel %vm352, %v351, 0
        %365 = vmatprep.subr.bf16.mxu0 %v310
        %366 = vmatpush1.bf16.msra.mxu0 %v304
        %367 = vmatprep.subr.bf16.mxu0 0
        %368 = vmatpush1.bf16.msra.mxu0 0
        %369 = vmatprep.subr.bf16.mxu0 0
        %370 = vmatpush1.bf16.msra.mxu0 0
        %371 = vmatprep.subr.bf16.mxu0 0
        %372 = vmatpush1.bf16.msra.mxu0 0
        %373 = vmatprep.subr.bf16.mxu0 0
        %374 = vmatpush1.bf16.msra.mxu0 0
        %375 = vmatprep.subr.bf16.mxu0 0
        %376 = vmatpush1.bf16.msra.mxu0 0
        %377 = vmatprep.subr.bf16.mxu0 0
        %378 = vmatpush1.bf16.msra.mxu0 0
        %379 = vmatprep.subr.bf16.mxu0 0
        %380 = vmatpush1.bf16.msra.mxu0 0
        %381 = vmatprep.subr.bf16.mxu0 0
        %382 = vmatpush1.bf16.msra.mxu0 0
        %383 = vmatprep.subr.bf16.mxu0 0
        %384 = vmatpush1.bf16.msra.mxu0 0
        %385 = vmatprep.subr.bf16.mxu0 0
        %386 = vmatpush1.bf16.msra.mxu0 0
        %387 = vmatprep.subr.bf16.mxu0 0
        %388 = vmatpush1.bf16.msra.mxu0 0
        %389 = vmatprep.subr.bf16.mxu0 0
        %390 = vmatpush1.bf16.msra.mxu0 0
        %391 = vmatprep.subr.bf16.mxu0 0
        %392 = vmatpush1.bf16.msra.mxu0 0
        %393 = vmatprep.subr.bf16.mxu0 0
        %394 = vmatpush1.bf16.msra.mxu0 0
        %395 = vmatprep.subr.bf16.mxu0 0
        %396 = vmatpush1.bf16.msra.mxu0 0
        %397 = vmatprep.mubr.bf16.mxu0 0
        %398 = vmatmul.mubr.bf16.gmra.mrb[0].mxu0 %v354
        %v399 = vpop.f32.mrb[0].mxu0
        %v400 = vadd.f32 0.0, %v399
        %v401 = vpop.f32.mrb[0].mxu0
        %v402 = vadd.f32 0.0, %v401
        %v403 = vpop.f32.mrb[0].mxu0
        %v404 = vadd.f32 0.0, %v403
        %v405 = vpop.f32.mrb[0].mxu0
        %v406 = vadd.f32 0.0, %v405
        %407 = vmatprep.mubr.bf16.mxu0 0
        %408 = vmatmul.mubr.bf16.gmra.mrb[0].mxu0 %v357
        %v409 = vpop.f32.mrb[0].mxu0
        %v410 = vadd.f32 0.0, %v409
        %v411 = vpop.f32.mrb[0].mxu0
        %v412 = vadd.f32 0.0, %v411
        %v413 = vpop.f32.mrb[0].mxu0
        %v414 = vadd.f32 0.0, %v413
        %v415 = vpop.f32.mrb[0].mxu0
        %v416 = vadd.f32 0.0, %v415
        %417 = vmatprep.mubr.bf16.mxu0 0
        %418 = vmatmul.mubr.bf16.gmra.mrb[0].mxu0 %v360
        %v419 = vpop.f32.mrb[0].mxu0
        %v420 = vadd.f32 0.0, %v419
        %v421 = vpop.f32.mrb[0].mxu0
        %v422 = vadd.f32 0.0, %v421
        %v423 = vpop.f32.mrb[0].mxu0
        %v424 = vadd.f32 0.0, %v423
        %v425 = vpop.f32.mrb[0].mxu0
        %v426 = vadd.f32 0.0, %v425
        %427 = vmatprep.mubr.bf16.mxu0 0
        %428 = vmatmul.mubr.bf16.gmra.mrb[0].mxu0 %v363
        %v429 = vpop.f32.mrb[0].mxu0
        %v430 = vadd.f32 0.0, %v429
        %v431 = vpop.f32.mrb[0].mxu0
        %v432 = vadd.f32 0.0, %v431
        %v433 = vpop.f32.mrb[0].mxu0
        %v434 = vadd.f32 0.0, %v433
        %v435 = vpop.f32.mrb[0].mxu0
        %v436 = vadd.f32 0.0, %v435
        %437 = vdwg.mxu0
        %438 = vmatprep.subr.bf16.mxu0 %v322
        %439 = vmatpush1.bf16.msra.mxu0 %v316
        %440 = vmatprep.subr.bf16.mxu0 0
        %441 = vmatpush1.bf16.msra.mxu0 0
        %442 = vmatprep.subr.bf16.mxu0 0
        %443 = vmatpush1.bf16.msra.mxu0 0
        %444 = vmatprep.subr.bf16.mxu0 0
        %445 = vmatpush1.bf16.msra.mxu0 0
        %446 = vmatprep.subr.bf16.mxu0 0
        %447 = vmatpush1.bf16.msra.mxu0 0
        %448 = vmatprep.subr.bf16.mxu0 0
        %449 = vmatpush1.bf16.msra.mxu0 0
        %450 = vmatprep.subr.bf16.mxu0 0
        %451 = vmatpush1.bf16.msra.mxu0 0
        %452 = vmatprep.subr.bf16.mxu0 0
        %453 = vmatpush1.bf16.msra.mxu0 0
        %454 = vmatprep.subr.bf16.mxu0 0
        %455 = vmatpush1.bf16.msra.mxu0 0
        %456 = vmatprep.subr.bf16.mxu0 0
        %457 = vmatpush1.bf16.msra.mxu0 0
        %458 = vmatprep.subr.bf16.mxu0 0
        %459 = vmatpush1.bf16.msra.mxu0 0
        %460 = vmatprep.subr.bf16.mxu0 0
        %461 = vmatpush1.bf16.msra.mxu0 0
        %462 = vmatprep.subr.bf16.mxu0 0
        %463 = vmatpush1.bf16.msra.mxu0 0
        %464 = vmatprep.subr.bf16.mxu0 0
        %465 = vmatpush1.bf16.msra.mxu0 0
        %466 = vmatprep.subr.bf16.mxu0 0
        %467 = vmatpush1.bf16.msra.mxu0 0
        %468 = vmatprep.subr.bf16.mxu0 0
        %469 = vmatpush1.bf16.msra.mxu0 0
        %470 = vmatprep.mubr.bf16.mxu0 0
        %471 = vmatmul.mubr.bf16.gmra.mrb[0].mxu0 %v354
        %v472 = vpop.f32.mrb[0].mxu0
        %v473 = vadd.f32 0.0, %v472
        %v474 = vpop.f32.mrb[0].mxu0
        %v475 = vadd.f32 0.0, %v474
        %v476 = vpop.f32.mrb[0].mxu0
        %v477 = vadd.f32 0.0, %v476
        %v478 = vpop.f32.mrb[0].mxu0
        %v479 = vadd.f32 0.0, %v478
        %480 = vmatprep.mubr.bf16.mxu0 0
        %481 = vmatmul.mubr.bf16.gmra.mrb[0].mxu0 %v357
        %v482 = vpop.f32.mrb[0].mxu0
        %v483 = vadd.f32 0.0, %v482
        %v484 = vpop.f32.mrb[0].mxu0
        %v485 = vadd.f32 0.0, %v484
        %v486 = vpop.f32.mrb[0].mxu0
        %v487 = vadd.f32 0.0, %v486
        %v488 = vpop.f32.mrb[0].mxu0
        %v489 = vadd.f32 0.0, %v488
        %490 = vmatprep.mubr.bf16.mxu0 0
        %491 = vmatmul.mubr.bf16.gmra.mrb[0].mxu0 %v360
        %v492 = vpop.f32.mrb[0].mxu0
        %v493 = vadd.f32 0.0, %v492
        %v494 = vpop.f32.mrb[0].mxu0
        %v495 = vadd.f32 0.0, %v494
        %v496 = vpop.f32.mrb[0].mxu0
        %v497 = vadd.f32 0.0, %v496
        %v498 = vpop.f32.mrb[0].mxu0
        %v499 = vadd.f32 0.0, %v498
        %500 = vmatprep.mubr.bf16.mxu0 0
        %501 = vmatmul.mubr.bf16.gmra.mrb[0].mxu0 %v363
        %v502 = vpop.f32.mrb[0].mxu0
        %v503 = vadd.f32 0.0, %v502
        %v504 = vpop.f32.mrb[0].mxu0
        %v505 = vadd.f32 0.0, %v504
        %v506 = vpop.f32.mrb[0].mxu0
        %v507 = vadd.f32 0.0, %v506
        %v508 = vpop.f32.mrb[0].mxu0
        %v509 = vadd.f32 0.0, %v508
        %510 = vdwg.mxu0
        %s511 = sld [smem:[#allocation5]]
        %v512 = vstv %s511
        %s513 = sld [smem:[#allocation5 + $0x1]]
        %v514 = vstv %s513
        %s515 = sld [smem:[#allocation5 + $0x2]]
        %v516 = vstv %s515
        %s517 = sld [smem:[#allocation5 + $0x3]]
        %v518 = vstv %s517
        %s519 = sld [smem:[#allocation5 + $0x4]]
        %v520 = vstv %s519
        %s521 = sld [smem:[#allocation5 + $0x5]]
        %v522 = vstv %s521
        %s523 = sld [smem:[#allocation5 + $0x6]]
        %v524 = vstv %s523
        %s525 = sld [smem:[#allocation5 + $0x7]]
        %v526 = vstv %s525
        %s527 = sld [smem:[#allocation3]]
        %v528 = vstv %s527
        %v529 = vmul.f32 %v528, %v400
        %v530 = vmul.f32 %v528, %v404
        %v531 = vadd.f32 %v512, %v529
        %v532 = vadd.f32 %v512, %v530
        %s533 = sld [smem:[#allocation3 + $0x1]]
        %v534 = vstv %s533
        %v535 = vmul.f32 %v534, %v400
        %v536 = vmul.f32 %v534, %v404
        %v537 = vadd.f32 %v514, %v535
        %v538 = vadd.f32 %v514, %v536
        %s539 = sld [smem:[#allocation3 + $0x2]]
        %v540 = vstv %s539
        %v541 = vmul.f32 %v540, %v400
        %v542 = vmul.f32 %v540, %v404
        %v543 = vadd.f32 %v516, %v541
        %v544 = vadd.f32 %v516, %v542
        %s545 = sld [smem:[#allocation3 + $0x3]]
        %v546 = vstv %s545
        %v547 = vmul.f32 %v546, %v400
        %v548 = vmul.f32 %v546, %v404
        %v549 = vadd.f32 %v518, %v547
        %v550 = vadd.f32 %v518, %v548
        %s551 = sld [smem:[#allocation3 + $0x4]]
        %v552 = vstv %s551
        %v553 = vmul.f32 %v552, %v400
        %v554 = vmul.f32 %v552, %v404
        %v555 = vadd.f32 %v520, %v553
        %v556 = vadd.f32 %v520, %v554
        %s557 = sld [smem:[#allocation3 + $0x5]]
        %v558 = vstv %s557
        %v559 = vmul.f32 %v558, %v400
        %v560 = vmul.f32 %v558, %v404
        %v561 = vadd.f32 %v522, %v559
        %v562 = vadd.f32 %v522, %v560
        %s563 = sld [smem:[#allocation3 + $0x6]]
        %v564 = vstv %s563
        %v565 = vmul.f32 %v564, %v400
        %v566 = vmul.f32 %v564, %v404
        %v567 = vadd.f32 %v524, %v565
        %v568 = vadd.f32 %v524, %v566
        %s569 = sld [smem:[#allocation3 + $0x7]]
        %v570 = vstv %s569
        %v571 = vmul.f32 %v570, %v400
        %v572 = vmul.f32 %v570, %v404
        %v573 = vadd.f32 %v526, %v571
        %v574 = vadd.f32 %v526, %v572
        %s575 = sld [smem:[#allocation3 + $0x8]]
        %v576 = vstv %s575
        %v577 = vmul.f32 %v576, %v402
        %v578 = vmul.f32 %v576, %v406
        %v579 = vadd.f32 %v531, %v577
        %v580 = vadd.f32 %v532, %v578
        %s581 = sld [smem:[#allocation3 + $0x9]]
        %v582 = vstv %s581
        %v583 = vmul.f32 %v582, %v402
        %v584 = vmul.f32 %v582, %v406
        %v585 = vadd.f32 %v537, %v583
        %v586 = vadd.f32 %v538, %v584
        %s587 = sld [smem:[#allocation3 + $0xa]]
        %v588 = vstv %s587
        %v589 = vmul.f32 %v588, %v402
        %v590 = vmul.f32 %v588, %v406
        %v591 = vadd.f32 %v543, %v589
        %v592 = vadd.f32 %v544, %v590
        %s593 = sld [smem:[#allocation3 + $0xb]]
        %v594 = vstv %s593
        %v595 = vmul.f32 %v594, %v402
        %v596 = vmul.f32 %v594, %v406
        %v597 = vadd.f32 %v549, %v595
        %v598 = vadd.f32 %v550, %v596
        %s599 = sld [smem:[#allocation3 + $0xc]]
        %v600 = vstv %s599
        %v601 = vmul.f32 %v600, %v402
        %v602 = vmul.f32 %v600, %v406
        %v603 = vadd.f32 %v555, %v601
        %v604 = vadd.f32 %v556, %v602
        %s605 = sld [smem:[#allocation3 + $0xd]]
        %v606 = vstv %s605
        %v607 = vmul.f32 %v606, %v402
        %v608 = vmul.f32 %v606, %v406
        %v609 = vadd.f32 %v561, %v607
        %v610 = vadd.f32 %v562, %v608
        %s611 = sld [smem:[#allocation3 + $0xe]]
        %v612 = vstv %s611
        %v613 = vmul.f32 %v612, %v402
        %v614 = vmul.f32 %v612, %v406
        %v615 = vadd.f32 %v567, %v613
        %v616 = vadd.f32 %v568, %v614
        %s617 = sld [smem:[#allocation3 + $0xf]]
        %v618 = vstv %s617
        %v619 = vmul.f32 %v618, %v402
        %v620 = vmul.f32 %v618, %v406
        %v621 = vadd.f32 %v573, %v619
        %v622 = vadd.f32 %v574, %v620
        %s623 = sld [smem:[#allocation3 + $0x10]]
        %v624 = vstv %s623
        %v625 = vmul.f32 %v624, %v473
        %v626 = vmul.f32 %v624, %v477
        %v627 = vadd.f32 %v579, %v625
        %v628 = vadd.f32 %v580, %v626
        %s629 = sld [smem:[#allocation3 + $0x11]]
        %v630 = vstv %s629
        %v631 = vmul.f32 %v630, %v473
        %v632 = vmul.f32 %v630, %v477
        %v633 = vadd.f32 %v585, %v631
        %v634 = vadd.f32 %v586, %v632
        %s635 = sld [smem:[#allocation3 + $0x12]]
        %v636 = vstv %s635
        %v637 = vmul.f32 %v636, %v473
        %v638 = vmul.f32 %v636, %v477
        %v639 = vadd.f32 %v591, %v637
        %v640 = vadd.f32 %v592, %v638
        %s641 = sld [smem:[#allocation3 + $0x13]]
        %v642 = vstv %s641
        %v643 = vmul.f32 %v642, %v473
        %v644 = vmul.f32 %v642, %v477
        %v645 = vadd.f32 %v597, %v643
        %v646 = vadd.f32 %v598, %v644
        %s647 = sld [smem:[#allocation3 + $0x14]]
        %v648 = vstv %s647
        %v649 = vmul.f32 %v648, %v473
        %v650 = vmul.f32 %v648, %v477
        %v651 = vadd.f32 %v603, %v649
        %v652 = vadd.f32 %v604, %v650
        %s653 = sld [smem:[#allocation3 + $0x15]]
        %v654 = vstv %s653
        %v655 = vmul.f32 %v654, %v473
        %v656 = vmul.f32 %v654, %v477
        %v657 = vadd.f32 %v609, %v655
        %v658 = vadd.f32 %v610, %v656
        %s659 = sld [smem:[#allocation3 + $0x16]]
        %v660 = vstv %s659
        %v661 = vmul.f32 %v660, %v473
        %v662 = vmul.f32 %v660, %v477
        %v663 = vadd.f32 %v615, %v661
        %v664 = vadd.f32 %v616, %v662
        %s665 = sld [smem:[#allocation3 + $0x17]]
        %v666 = vstv %s665
        %v667 = vmul.f32 %v666, %v473
        %v668 = vmul.f32 %v666, %v477
        %v669 = vadd.f32 %v621, %v667
        %v670 = vadd.f32 %v622, %v668
        %s671 = sld [smem:[#allocation3 + $0x18]]
        %v672 = vstv %s671
        %v673 = vmul.f32 %v672, %v475
        %v674 = vmul.f32 %v672, %v479
        %v675 = vadd.f32 %v627, %v673
        %v676 = vadd.f32 %v628, %v674
        %s677 = sld [smem:[#allocation3 + $0x19]]
        %v678 = vstv %s677
        %v679 = vmul.f32 %v678, %v475
        %v680 = vmul.f32 %v678, %v479
        %v681 = vadd.f32 %v633, %v679
        %v682 = vadd.f32 %v634, %v680
        %s683 = sld [smem:[#allocation3 + $0x1a]]
        %v684 = vstv %s683
        %v685 = vmul.f32 %v684, %v475
        %v686 = vmul.f32 %v684, %v479
        %v687 = vadd.f32 %v639, %v685
        %v688 = vadd.f32 %v640, %v686
        %s689 = sld [smem:[#allocation3 + $0x1b]]
        %v690 = vstv %s689
        %v691 = vmul.f32 %v690, %v475
        %v692 = vmul.f32 %v690, %v479
        %v693 = vadd.f32 %v645, %v691
        %v694 = vadd.f32 %v646, %v692
        %s695 = sld [smem:[#allocation3 + $0x1c]]
        %v696 = vstv %s695
        %v697 = vmul.f32 %v696, %v475
        %v698 = vmul.f32 %v696, %v479
        %v699 = vadd.f32 %v651, %v697
        %v700 = vadd.f32 %v652, %v698
        %s701 = sld [smem:[#allocation3 + $0x1d]]
        %v702 = vstv %s701
        %v703 = vmul.f32 %v702, %v475
        %v704 = vmul.f32 %v702, %v479
        %v705 = vadd.f32 %v657, %v703
        %v706 = vadd.f32 %v658, %v704
        %s707 = sld [smem:[#allocation3 + $0x1e]]
        %v708 = vstv %s707
        %v709 = vmul.f32 %v708, %v475
        %v710 = vmul.f32 %v708, %v479
        %v711 = vadd.f32 %v663, %v709
        %v712 = vadd.f32 %v664, %v710
        %s713 = sld [smem:[#allocation3 + $0x1f]]
        %v714 = vstv %s713
        %v715 = vmul.f32 %v714, %v475
        %v716 = vmul.f32 %v714, %v479
        %v717 = vadd.f32 %v669, %v715
        %v718 = vadd.f32 %v670, %v716
        %s719 = sld [smem:[#allocation3 + $0x20]]
        %v720 = vstv %s719
        %v721 = vmul.f32 %v720, %v410
        %v722 = vmul.f32 %v720, %v414
        %v723 = vadd.f32 %v675, %v721
        %v724 = vadd.f32 %v676, %v722
        %s725 = sld [smem:[#allocation3 + $0x21]]
        %v726 = vstv %s725
        %v727 = vmul.f32 %v726, %v410
        %v728 = vmul.f32 %v726, %v414
        %v729 = vadd.f32 %v681, %v727
        %v730 = vadd.f32 %v682, %v728
        %s731 = sld [smem:[#allocation3 + $0x22]]
        %v732 = vstv %s731
        %v733 = vmul.f32 %v732, %v410
        %v734 = vmul.f32 %v732, %v414
        %v735 = vadd.f32 %v687, %v733
        %v736 = vadd.f32 %v688, %v734
        %s737 = sld [smem:[#allocation3 + $0x23]]
        %v738 = vstv %s737
        %v739 = vmul.f32 %v738, %v410
        %v740 = vmul.f32 %v738, %v414
        %v741 = vadd.f32 %v693, %v739
        %v742 = vadd.f32 %v694, %v740
        %s743 = sld [smem:[#allocation3 + $0x24]]
        %v744 = vstv %s743
        %v745 = vmul.f32 %v744, %v410
        %v746 = vmul.f32 %v744, %v414
        %v747 = vadd.f32 %v699, %v745
        %v748 = vadd.f32 %v700, %v746
        %s749 = sld [smem:[#allocation3 + $0x25]]
        %v750 = vstv %s749
        %v751 = vmul.f32 %v750, %v410
        %v752 = vmul.f32 %v750, %v414
        %v753 = vadd.f32 %v705, %v751
        %v754 = vadd.f32 %v706, %v752
        %s755 = sld [smem:[#allocation3 + $0x26]]
        %v756 = vstv %s755
        %v757 = vmul.f32 %v756, %v410
        %v758 = vmul.f32 %v756, %v414
        %v759 = vadd.f32 %v711, %v757
        %v760 = vadd.f32 %v712, %v758
        %s761 = sld [smem:[#allocation3 + $0x27]]
        %v762 = vstv %s761
        %v763 = vmul.f32 %v762, %v410
        %v764 = vmul.f32 %v762, %v414
        %v765 = vadd.f32 %v717, %v763
        %v766 = vadd.f32 %v718, %v764
        %s767 = sld [smem:[#allocation3 + $0x28]]
        %v768 = vstv %s767
        %v769 = vmul.f32 %v768, %v412
        %v770 = vmul.f32 %v768, %v416
        %v771 = vadd.f32 %v723, %v769
        %v772 = vadd.f32 %v724, %v770
        %s773 = sld [smem:[#allocation3 + $0x29]]
        %v774 = vstv %s773
        %v775 = vmul.f32 %v774, %v412
        %v776 = vmul.f32 %v774, %v416
        %v777 = vadd.f32 %v729, %v775
        %v778 = vadd.f32 %v730, %v776
        %s779 = sld [smem:[#allocation3 + $0x2a]]
        %v780 = vstv %s779
        %v781 = vmul.f32 %v780, %v412
        %v782 = vmul.f32 %v780, %v416
        %v783 = vadd.f32 %v735, %v781
        %v784 = vadd.f32 %v736, %v782
        %s785 = sld [smem:[#allocation3 + $0x2b]]
        %v786 = vstv %s785
        %v787 = vmul.f32 %v786, %v412
        %v788 = vmul.f32 %v786, %v416
        %v789 = vadd.f32 %v741, %v787
        %v790 = vadd.f32 %v742, %v788
        %s791 = sld [smem:[#allocation3 + $0x2c]]
        %v792 = vstv %s791
        %v793 = vmul.f32 %v792, %v412
        %v794 = vmul.f32 %v792, %v416
        %v795 = vadd.f32 %v747, %v793
        %v796 = vadd.f32 %v748, %v794
        %s797 = sld [smem:[#allocation3 + $0x2d]]
        %v798 = vstv %s797
        %v799 = vmul.f32 %v798, %v412
        %v800 = vmul.f32 %v798, %v416
        %v801 = vadd.f32 %v753, %v799
        %v802 = vadd.f32 %v754, %v800
        %s803 = sld [smem:[#allocation3 + $0x2e]]
        %v804 = vstv %s803
        %v805 = vmul.f32 %v804, %v412
        %v806 = vmul.f32 %v804, %v416
        %v807 = vadd.f32 %v759, %v805
        %v808 = vadd.f32 %v760, %v806
        %s809 = sld [smem:[#allocation3 + $0x2f]]
        %v810 = vstv %s809
        %v811 = vmul.f32 %v810, %v412
        %v812 = vmul.f32 %v810, %v416
        %v813 = vadd.f32 %v765, %v811
        %v814 = vadd.f32 %v766, %v812
        %s815 = sld [smem:[#allocation3 + $0x30]]
        %v816 = vstv %s815
        %v817 = vmul.f32 %v816, %v483
        %v818 = vmul.f32 %v816, %v487
        %v819 = vadd.f32 %v771, %v817
        %v820 = vadd.f32 %v772, %v818
        %s821 = sld [smem:[#allocation3 + $0x31]]
        %v822 = vstv %s821
        %v823 = vmul.f32 %v822, %v483
        %v824 = vmul.f32 %v822, %v487
        %v825 = vadd.f32 %v777, %v823
        %v826 = vadd.f32 %v778, %v824
        %s827 = sld [smem:[#allocation3 + $0x32]]
        %v828 = vstv %s827
        %v829 = vmul.f32 %v828, %v483
        %v830 = vmul.f32 %v828, %v487
        %v831 = vadd.f32 %v783, %v829
        %v832 = vadd.f32 %v784, %v830
        %s833 = sld [smem:[#allocation3 + $0x33]]
        %v834 = vstv %s833
        %v835 = vmul.f32 %v834, %v483
        %v836 = vmul.f32 %v834, %v487
        %v837 = vadd.f32 %v789, %v835
        %v838 = vadd.f32 %v790, %v836
        %s839 = sld [smem:[#allocation3 + $0x34]]
        %v840 = vstv %s839
        %v841 = vmul.f32 %v840, %v483
        %v842 = vmul.f32 %v840, %v487
        %v843 = vadd.f32 %v795, %v841
        %v844 = vadd.f32 %v796, %v842
        %s845 = sld [smem:[#allocation3 + $0x35]]
        %v846 = vstv %s845
        %v847 = vmul.f32 %v846, %v483
        %v848 = vmul.f32 %v846, %v487
        %v849 = vadd.f32 %v801, %v847
        %v850 = vadd.f32 %v802, %v848
        %s851 = sld [smem:[#allocation3 + $0x36]]
        %v852 = vstv %s851
        %v853 = vmul.f32 %v852, %v483
        %v854 = vmul.f32 %v852, %v487
        %v855 = vadd.f32 %v807, %v853
        %v856 = vadd.f32 %v808, %v854
        %s857 = sld [smem:[#allocation3 + $0x37]]
        %v858 = vstv %s857
        %v859 = vmul.f32 %v858, %v483
        %v860 = vmul.f32 %v858, %v487
        %v861 = vadd.f32 %v813, %v859
        %v862 = vadd.f32 %v814, %v860
        %s863 = sld [smem:[#allocation3 + $0x38]]
        %v864 = vstv %s863
        %v865 = vmul.f32 %v864, %v485
        %v866 = vmul.f32 %v864, %v489
        %v867 = vadd.f32 %v819, %v865
        %v868 = vadd.f32 %v820, %v866
        %s869 = sld [smem:[#allocation3 + $0x39]]
        %v870 = vstv %s869
        %v871 = vmul.f32 %v870, %v485
        %v872 = vmul.f32 %v870, %v489
        %v873 = vadd.f32 %v825, %v871
        %v874 = vadd.f32 %v826, %v872
        %s875 = sld [smem:[#allocation3 + $0x3a]]
        %v876 = vstv %s875
        %v877 = vmul.f32 %v876, %v485
        %v878 = vmul.f32 %v876, %v489
        %v879 = vadd.f32 %v831, %v877
        %v880 = vadd.f32 %v832, %v878
        %s881 = sld [smem:[#allocation3 + $0x3b]]
        %v882 = vstv %s881
        %v883 = vmul.f32 %v882, %v485
        %v884 = vmul.f32 %v882, %v489
        %v885 = vadd.f32 %v837, %v883
        %v886 = vadd.f32 %v838, %v884
        %s887 = sld [smem:[#allocation3 + $0x3c]]
        %v888 = vstv %s887
        %v889 = vmul.f32 %v888, %v485
        %v890 = vmul.f32 %v888, %v489
        %v891 = vadd.f32 %v843, %v889
        %v892 = vadd.f32 %v844, %v890
        %s893 = sld [smem:[#allocation3 + $0x3d]]
        %v894 = vstv %s893
        %v895 = vmul.f32 %v894, %v485
        %v896 = vmul.f32 %v894, %v489
        %v897 = vadd.f32 %v849, %v895
        %v898 = vadd.f32 %v850, %v896
        %s899 = sld [smem:[#allocation3 + $0x3e]]
        %v900 = vstv %s899
        %v901 = vmul.f32 %v900, %v485
        %v902 = vmul.f32 %v900, %v489
        %v903 = vadd.f32 %v855, %v901
        %v904 = vadd.f32 %v856, %v902
        %s905 = sld [smem:[#allocation3 + $0x3f]]
        %v906 = vstv %s905
        %v907 = vmul.f32 %v906, %v485
        %v908 = vmul.f32 %v906, %v489
        %v909 = vadd.f32 %v861, %v907
        %v910 = vadd.f32 %v862, %v908
        %s911 = sld [smem:[#allocation3 + $0x40]]
        %v912 = vstv %s911
        %v913 = vmul.f32 %v912, %v420
        %v914 = vmul.f32 %v912, %v424
        %v915 = vadd.f32 %v867, %v913
        %v916 = vadd.f32 %v868, %v914
        %s917 = sld [smem:[#allocation3 + $0x41]]
        %v918 = vstv %s917
        %v919 = vmul.f32 %v918, %v420
        %v920 = vmul.f32 %v918, %v424
        %v921 = vadd.f32 %v873, %v919
        %v922 = vadd.f32 %v874, %v920
        %s923 = sld [smem:[#allocation3 + $0x42]]
        %v924 = vstv %s923
        %v925 = vmul.f32 %v924, %v420
        %v926 = vmul.f32 %v924, %v424
        %v927 = vadd.f32 %v879, %v925
        %v928 = vadd.f32 %v880, %v926
        %s929 = sld [smem:[#allocation3 + $0x43]]
        %v930 = vstv %s929
        %v931 = vmul.f32 %v930, %v420
        %v932 = vmul.f32 %v930, %v424
        %v933 = vadd.f32 %v885, %v931
        %v934 = vadd.f32 %v886, %v932
        %s935 = sld [smem:[#allocation3 + $0x44]]
        %v936 = vstv %s935
        %v937 = vmul.f32 %v936, %v420
        %v938 = vmul.f32 %v936, %v424
        %v939 = vadd.f32 %v891, %v937
        %v940 = vadd.f32 %v892, %v938
        %s941 = sld [smem:[#allocation3 + $0x45]]
        %v942 = vstv %s941
        %v943 = vmul.f32 %v942, %v420
        %v944 = vmul.f32 %v942, %v424
        %v945 = vadd.f32 %v897, %v943
        %v946 = vadd.f32 %v898, %v944
        %s947 = sld [smem:[#allocation3 + $0x46]]
        %v948 = vstv %s947
        %v949 = vmul.f32 %v948, %v420
        %v950 = vmul.f32 %v948, %v424
        %v951 = vadd.f32 %v903, %v949
        %v952 = vadd.f32 %v904, %v950
        %s953 = sld [smem:[#allocation3 + $0x47]]
        %v954 = vstv %s953
        %v955 = vmul.f32 %v954, %v420
        %v956 = vmul.f32 %v954, %v424
        %v957 = vadd.f32 %v909, %v955
        %v958 = vadd.f32 %v910, %v956
        %s959 = sld [smem:[#allocation3 + $0x48]]
        %v960 = vstv %s959
        %v961 = vmul.f32 %v960, %v422
        %v962 = vmul.f32 %v960, %v426
        %v963 = vadd.f32 %v915, %v961
        %v964 = vadd.f32 %v916, %v962
        %s965 = sld [smem:[#allocation3 + $0x49]]
        %v966 = vstv %s965
        %v967 = vmul.f32 %v966, %v422
        %v968 = vmul.f32 %v966, %v426
        %v969 = vadd.f32 %v921, %v967
        %v970 = vadd.f32 %v922, %v968
        %s971 = sld [smem:[#allocation3 + $0x4a]]
        %v972 = vstv %s971
        %v973 = vmul.f32 %v972, %v422
        %v974 = vmul.f32 %v972, %v426
        %v975 = vadd.f32 %v927, %v973
        %v976 = vadd.f32 %v928, %v974
        %s977 = sld [smem:[#allocation3 + $0x4b]]
        %v978 = vstv %s977
        %v979 = vmul.f32 %v978, %v422
        %v980 = vmul.f32 %v978, %v426
        %v981 = vadd.f32 %v933, %v979
        %v982 = vadd.f32 %v934, %v980
        %s983 = sld [smem:[#allocation3 + $0x4c]]
        %v984 = vstv %s983
        %v985 = vmul.f32 %v984, %v422
        %v986 = vmul.f32 %v984, %v426
        %v987 = vadd.f32 %v939, %v985
        %v988 = vadd.f32 %v940, %v986
        %s989 = sld [smem:[#allocation3 + $0x4d]]
        %v990 = vstv %s989
        %v991 = vmul.f32 %v990, %v422
        %v992 = vmul.f32 %v990, %v426
        %v993 = vadd.f32 %v945, %v991
        %v994 = vadd.f32 %v946, %v992
        %s995 = sld [smem:[#allocation3 + $0x4e]]
        %v996 = vstv %s995
        %v997 = vmul.f32 %v996, %v422
        %v998 = vmul.f32 %v996, %v426
        %v999 = vadd.f32 %v951, %v997
        %v1000 = vadd.f32 %v952, %v998
        %s1001 = sld [smem:[#allocation3 + $0x4f]]
        %v1002 = vstv %s1001
        %v1003 = vmul.f32 %v1002, %v422
        %v1004 = vmul.f32 %v1002, %v426
        %v1005 = vadd.f32 %v957, %v1003
        %v1006 = vadd.f32 %v958, %v1004
        %s1007 = sld [smem:[#allocation3 + $0x50]]
        %v1008 = vstv %s1007
        %v1009 = vmul.f32 %v1008, %v493
        %v1010 = vmul.f32 %v1008, %v497
        %v1011 = vadd.f32 %v963, %v1009
        %v1012 = vadd.f32 %v964, %v1010
        %s1013 = sld [smem:[#allocation3 + $0x51]]
        %v1014 = vstv %s1013
        %v1015 = vmul.f32 %v1014, %v493
        %v1016 = vmul.f32 %v1014, %v497
        %v1017 = vadd.f32 %v969, %v1015
        %v1018 = vadd.f32 %v970, %v1016
        %s1019 = sld [smem:[#allocation3 + $0x52]]
        %v1020 = vstv %s1019
        %v1021 = vmul.f32 %v1020, %v493
        %v1022 = vmul.f32 %v1020, %v497
        %v1023 = vadd.f32 %v975, %v1021
        %v1024 = vadd.f32 %v976, %v1022
        %s1025 = sld [smem:[#allocation3 + $0x53]]
        %v1026 = vstv %s1025
        %v1027 = vmul.f32 %v1026, %v493
        %v1028 = vmul.f32 %v1026, %v497
        %v1029 = vadd.f32 %v981, %v1027
        %v1030 = vadd.f32 %v982, %v1028
        %s1031 = sld [smem:[#allocation3 + $0x54]]
        %v1032 = vstv %s1031
        %v1033 = vmul.f32 %v1032, %v493
        %v1034 = vmul.f32 %v1032, %v497
        %v1035 = vadd.f32 %v987, %v1033
        %v1036 = vadd.f32 %v988, %v1034
        %s1037 = sld [smem:[#allocation3 + $0x55]]
        %v1038 = vstv %s1037
        %v1039 = vmul.f32 %v1038, %v493
        %v1040 = vmul.f32 %v1038, %v497
        %v1041 = vadd.f32 %v993, %v1039
        %v1042 = vadd.f32 %v994, %v1040
        %s1043 = sld [smem:[#allocation3 + $0x56]]
        %v1044 = vstv %s1043
        %v1045 = vmul.f32 %v1044, %v493
        %v1046 = vmul.f32 %v1044, %v497
        %v1047 = vadd.f32 %v999, %v1045
        %v1048 = vadd.f32 %v1000, %v1046
        %s1049 = sld [smem:[#allocation3 + $0x57]]
        %v1050 = vstv %s1049
        %v1051 = vmul.f32 %v1050, %v493
        %v1052 = vmul.f32 %v1050, %v497
        %v1053 = vadd.f32 %v1005, %v1051
        %v1054 = vadd.f32 %v1006, %v1052
        %s1055 = sld [smem:[#allocation3 + $0x58]]
        %v1056 = vstv %s1055
        %v1057 = vmul.f32 %v1056, %v495
        %v1058 = vmul.f32 %v1056, %v499
        %v1059 = vadd.f32 %v1011, %v1057
        %v1060 = vadd.f32 %v1012, %v1058
        %s1061 = sld [smem:[#allocation3 + $0x59]]
        %v1062 = vstv %s1061
        %v1063 = vmul.f32 %v1062, %v495
        %v1064 = vmul.f32 %v1062, %v499
        %v1065 = vadd.f32 %v1017, %v1063
        %v1066 = vadd.f32 %v1018, %v1064
        %s1067 = sld [smem:[#allocation3 + $0x5a]]
        %v1068 = vstv %s1067
        %v1069 = vmul.f32 %v1068, %v495
        %v1070 = vmul.f32 %v1068, %v499
        %v1071 = vadd.f32 %v1023, %v1069
        %v1072 = vadd.f32 %v1024, %v1070
        %s1073 = sld [smem:[#allocation3 + $0x5b]]
        %v1074 = vstv %s1073
        %v1075 = vmul.f32 %v1074, %v495
        %v1076 = vmul.f32 %v1074, %v499
        %v1077 = vadd.f32 %v1029, %v1075
        %v1078 = vadd.f32 %v1030, %v1076
        %s1079 = sld [smem:[#allocation3 + $0x5c]]
        %v1080 = vstv %s1079
        %v1081 = vmul.f32 %v1080, %v495
        %v1082 = vmul.f32 %v1080, %v499
        %v1083 = vadd.f32 %v1035, %v1081
        %v1084 = vadd.f32 %v1036, %v1082
        %s1085 = sld [smem:[#allocation3 + $0x5d]]
        %v1086 = vstv %s1085
        %v1087 = vmul.f32 %v1086, %v495
        %v1088 = vmul.f32 %v1086, %v499
        %v1089 = vadd.f32 %v1041, %v1087
        %v1090 = vadd.f32 %v1042, %v1088
        %s1091 = sld [smem:[#allocation3 + $0x5e]]
        %v1092 = vstv %s1091
        %v1093 = vmul.f32 %v1092, %v495
        %v1094 = vmul.f32 %v1092, %v499
        %v1095 = vadd.f32 %v1047, %v1093
        %v1096 = vadd.f32 %v1048, %v1094
        %s1097 = sld [smem:[#allocation3 + $0x5f]]
        %v1098 = vstv %s1097
        %v1099 = vmul.f32 %v1098, %v495
        %v1100 = vmul.f32 %v1098, %v499
        %v1101 = vadd.f32 %v1053, %v1099
        %v1102 = vadd.f32 %v1054, %v1100
        %s1103 = sld [smem:[#allocation3 + $0x60]]
        %v1104 = vstv %s1103
        %v1105 = vmul.f32 %v1104, %v430
        %v1106 = vmul.f32 %v1104, %v434
        %v1107 = vadd.f32 %v1059, %v1105
        %v1108 = vadd.f32 %v1060, %v1106
        %s1109 = sld [smem:[#allocation3 + $0x61]]
        %v1110 = vstv %s1109
        %v1111 = vmul.f32 %v1110, %v430
        %v1112 = vmul.f32 %v1110, %v434
        %v1113 = vadd.f32 %v1065, %v1111
        %v1114 = vadd.f32 %v1066, %v1112
        %s1115 = sld [smem:[#allocation3 + $0x62]]
        %v1116 = vstv %s1115
        %v1117 = vmul.f32 %v1116, %v430
        %v1118 = vmul.f32 %v1116, %v434
        %v1119 = vadd.f32 %v1071, %v1117
        %v1120 = vadd.f32 %v1072, %v1118
        %s1121 = sld [smem:[#allocation3 + $0x63]]
        %v1122 = vstv %s1121
        %v1123 = vmul.f32 %v1122, %v430
        %v1124 = vmul.f32 %v1122, %v434
        %v1125 = vadd.f32 %v1077, %v1123
        %v1126 = vadd.f32 %v1078, %v1124
        %s1127 = sld [smem:[#allocation3 + $0x64]]
        %v1128 = vstv %s1127
        %v1129 = vmul.f32 %v1128, %v430
        %v1130 = vmul.f32 %v1128, %v434
        %v1131 = vadd.f32 %v1083, %v1129
        %v1132 = vadd.f32 %v1084, %v1130
        %s1133 = sld [smem:[#allocation3 + $0x65]]
        %v1134 = vstv %s1133
        %v1135 = vmul.f32 %v1134, %v430
        %v1136 = vmul.f32 %v1134, %v434
        %v1137 = vadd.f32 %v1089, %v1135
        %v1138 = vadd.f32 %v1090, %v1136
        %s1139 = sld [smem:[#allocation3 + $0x66]]
        %v1140 = vstv %s1139
        %v1141 = vmul.f32 %v1140, %v430
        %v1142 = vmul.f32 %v1140, %v434
        %v1143 = vadd.f32 %v1095, %v1141
        %v1144 = vadd.f32 %v1096, %v1142
        %s1145 = sld [smem:[#allocation3 + $0x67]]
        %v1146 = vstv %s1145
        %v1147 = vmul.f32 %v1146, %v430
        %v1148 = vmul.f32 %v1146, %v434
        %v1149 = vadd.f32 %v1101, %v1147
        %v1150 = vadd.f32 %v1102, %v1148
        %s1151 = sld [smem:[#allocation3 + $0x68]]
        %v1152 = vstv %s1151
        %v1153 = vmul.f32 %v1152, %v432
        %v1154 = vmul.f32 %v1152, %v436
        %v1155 = vadd.f32 %v1107, %v1153
        %v1156 = vadd.f32 %v1108, %v1154
        %s1157 = sld [smem:[#allocation3 + $0x69]]
        %v1158 = vstv %s1157
        %v1159 = vmul.f32 %v1158, %v432
        %v1160 = vmul.f32 %v1158, %v436
        %v1161 = vadd.f32 %v1113, %v1159
        %v1162 = vadd.f32 %v1114, %v1160
        %s1163 = sld [smem:[#allocation3 + $0x6a]]
        %v1164 = vstv %s1163
        %v1165 = vmul.f32 %v1164, %v432
        %v1166 = vmul.f32 %v1164, %v436
        %v1167 = vadd.f32 %v1119, %v1165
        %v1168 = vadd.f32 %v1120, %v1166
        %s1169 = sld [smem:[#allocation3 + $0x6b]]
        %v1170 = vstv %s1169
        %v1171 = vmul.f32 %v1170, %v432
        %v1172 = vmul.f32 %v1170, %v436
        %v1173 = vadd.f32 %v1125, %v1171
        %v1174 = vadd.f32 %v1126, %v1172
        %s1175 = sld [smem:[#allocation3 + $0x6c]]
        %v1176 = vstv %s1175
        %v1177 = vmul.f32 %v1176, %v432
        %v1178 = vmul.f32 %v1176, %v436
        %v1179 = vadd.f32 %v1131, %v1177
        %v1180 = vadd.f32 %v1132, %v1178
        %s1181 = sld [smem:[#allocation3 + $0x6d]]
        %v1182 = vstv %s1181
        %v1183 = vmul.f32 %v1182, %v432
        %v1184 = vmul.f32 %v1182, %v436
        %v1185 = vadd.f32 %v1137, %v1183
        %v1186 = vadd.f32 %v1138, %v1184
        %s1187 = sld [smem:[#allocation3 + $0x6e]]
        %v1188 = vstv %s1187
        %v1189 = vmul.f32 %v1188, %v432
        %v1190 = vmul.f32 %v1188, %v436
        %v1191 = vadd.f32 %v1143, %v1189
        %v1192 = vadd.f32 %v1144, %v1190
        %s1193 = sld [smem:[#allocation3 + $0x6f]]
        %v1194 = vstv %s1193
        %v1195 = vmul.f32 %v1194, %v432
        %v1196 = vmul.f32 %v1194, %v436
        %v1197 = vadd.f32 %v1149, %v1195
        %v1198 = vadd.f32 %v1150, %v1196
        %s1199 = sld [smem:[#allocation3 + $0x70]]
        %v1200 = vstv %s1199
        %v1201 = vmul.f32 %v1200, %v503
        %v1202 = vmul.f32 %v1200, %v507
        %v1203 = vadd.f32 %v1155, %v1201
        %v1204 = vadd.f32 %v1156, %v1202
        %s1205 = sld [smem:[#allocation3 + $0x71]]
        %v1206 = vstv %s1205
        %v1207 = vmul.f32 %v1206, %v503
        %v1208 = vmul.f32 %v1206, %v507
        %v1209 = vadd.f32 %v1161, %v1207
        %v1210 = vadd.f32 %v1162, %v1208
        %s1211 = sld [smem:[#allocation3 + $0x72]]
        %v1212 = vstv %s1211
        %v1213 = vmul.f32 %v1212, %v503
        %v1214 = vmul.f32 %v1212, %v507
        %v1215 = vadd.f32 %v1167, %v1213
        %v1216 = vadd.f32 %v1168, %v1214
        %s1217 = sld [smem:[#allocation3 + $0x73]]
        %v1218 = vstv %s1217
        %v1219 = vmul.f32 %v1218, %v503
        %v1220 = vmul.f32 %v1218, %v507
        %v1221 = vadd.f32 %v1173, %v1219
        %v1222 = vadd.f32 %v1174, %v1220
        %s1223 = sld [smem:[#allocation3 + $0x74]]
        %v1224 = vstv %s1223
        %v1225 = vmul.f32 %v1224, %v503
        %v1226 = vmul.f32 %v1224, %v507
        %v1227 = vadd.f32 %v1179, %v1225
        %v1228 = vadd.f32 %v1180, %v1226
        %s1229 = sld [smem:[#allocation3 + $0x75]]
        %v1230 = vstv %s1229
        %v1231 = vmul.f32 %v1230, %v503
        %v1232 = vmul.f32 %v1230, %v507
        %v1233 = vadd.f32 %v1185, %v1231
        %v1234 = vadd.f32 %v1186, %v1232
        %s1235 = sld [smem:[#allocation3 + $0x76]]
        %v1236 = vstv %s1235
        %v1237 = vmul.f32 %v1236, %v503
        %v1238 = vmul.f32 %v1236, %v507
        %v1239 = vadd.f32 %v1191, %v1237
        %v1240 = vadd.f32 %v1192, %v1238
        %s1241 = sld [smem:[#allocation3 + $0x77]]
        %v1242 = vstv %s1241
        %v1243 = vmul.f32 %v1242, %v503
        %v1244 = vmul.f32 %v1242, %v507
        %v1245 = vadd.f32 %v1197, %v1243
        %v1246 = vadd.f32 %v1198, %v1244
        %s1247 = sld [smem:[#allocation3 + $0x78]]
        %v1248 = vstv %s1247
        %v1249 = vmul.f32 %v1248, %v505
        %v1250 = vmul.f32 %v1248, %v509
        %v1251 = vadd.f32 %v1203, %v1249
        %v1252 = vadd.f32 %v1204, %v1250
        %s1253 = sld [smem:[#allocation3 + $0x79]]
        %v1254 = vstv %s1253
        %v1255 = vmul.f32 %v1254, %v505
        %v1256 = vmul.f32 %v1254, %v509
        %v1257 = vadd.f32 %v1209, %v1255
        %v1258 = vadd.f32 %v1210, %v1256
        %s1259 = sld [smem:[#allocation3 + $0x7a]]
        %v1260 = vstv %s1259
        %v1261 = vmul.f32 %v1260, %v505
        %v1262 = vmul.f32 %v1260, %v509
        %v1263 = vadd.f32 %v1215, %v1261
        %v1264 = vadd.f32 %v1216, %v1262
        %s1265 = sld [smem:[#allocation3 + $0x7b]]
        %v1266 = vstv %s1265
        %v1267 = vmul.f32 %v1266, %v505
        %v1268 = vmul.f32 %v1266, %v509
        %v1269 = vadd.f32 %v1221, %v1267
        %v1270 = vadd.f32 %v1222, %v1268
        %s1271 = sld [smem:[#allocation3 + $0x7c]]
        %v1272 = vstv %s1271
        %v1273 = vmul.f32 %v1272, %v505
        %v1274 = vmul.f32 %v1272, %v509
        %v1275 = vadd.f32 %v1227, %v1273
        %v1276 = vadd.f32 %v1228, %v1274
        %s1277 = sld [smem:[#allocation3 + $0x7d]]
        %v1278 = vstv %s1277
        %v1279 = vmul.f32 %v1278, %v505
        %v1280 = vmul.f32 %v1278, %v509
        %v1281 = vadd.f32 %v1233, %v1279
        %v1282 = vadd.f32 %v1234, %v1280
        %s1283 = sld [smem:[#allocation3 + $0x7e]]
        %v1284 = vstv %s1283
        %v1285 = vmul.f32 %v1284, %v505
        %v1286 = vmul.f32 %v1284, %v509
        %v1287 = vadd.f32 %v1239, %v1285
        %v1288 = vadd.f32 %v1240, %v1286
        %s1289 = sld [smem:[#allocation3 + $0x7f]]
        %v1290 = vstv %s1289
        %v1291 = vmul.f32 %v1290, %v505
        %v1292 = vmul.f32 %v1290, %v509
        %v1293 = vadd.f32 %v1245, %v1291
        %v1294 = vadd.f32 %v1246, %v1292
        %1295 = vst [vmem:[%s287] sm:$0xff] %v1251
        %1296 = vst [vmem:[%s287 + $0x8] sm:$0xff] %v1252
        %s1297 = scalar_lea.vmem %s287, 16 [#allocation7]
        %1298 = vst [vmem:[%s1297] sm:$0xff] %v1257
        %1299 = vst [vmem:[%s1297 + $0x8] sm:$0xff] %v1258
        %s1300 = scalar_lea.vmem %s287, 32 [#allocation7]
        %1301 = vst [vmem:[%s1300] sm:$0xff] %v1263
        %1302 = vst [vmem:[%s1300 + $0x8] sm:$0xff] %v1264
        %s1303 = scalar_lea.vmem %s287, 48 [#allocation7]
        %1304 = vst [vmem:[%s1303] sm:$0xff] %v1269
        %1305 = vst [vmem:[%s1303 + $0x8] sm:$0xff] %v1270
        %s1306 = scalar_lea.vmem %s287, 64 [#allocation7]
        %1307 = vst [vmem:[%s1306] sm:$0xff] %v1275
        %1308 = vst [vmem:[%s1306 + $0x8] sm:$0xff] %v1276
        %s1309 = scalar_lea.vmem %s287, 80 [#allocation7]
        %1310 = vst [vmem:[%s1309] sm:$0xff] %v1281
        %1311 = vst [vmem:[%s1309 + $0x8] sm:$0xff] %v1282
        %s1312 = scalar_lea.vmem %s287, 96 [#allocation7]
        %1313 = vst [vmem:[%s1312] sm:$0xff] %v1287
        %1314 = vst [vmem:[%s1312 + $0x8] sm:$0xff] %v1288
        %s1315 = scalar_lea.vmem %s287, 112 [#allocation7]
        %1316 = vst [vmem:[%s1315] sm:$0xff] %v1293
        %1317 = vst [vmem:[%s1315 + $0x8] sm:$0xff] %v1294
        %s1318 = sand.u32 %s114, 1
        %s1319 = sand.u32 %s114, 1
        %s1320 = smul.addr %s1319, 128
        %s1321 = scalar_lea.vmem [#allocation7], %s1320
        // Predicated region
        $region86: #{_spatial_conv_jit.1} parent=72 // pred_check
          %p1322 = pneg %p124
        $region87: #{_spatial_conv_jit.1} parent=72 // pred_check_branch
          %1324 = sbr.rel (%p1322) target = $region89
        $region88: #{_spatial_conv_jit.1} parent=72 // pred_region
          %s1325 = smul.addr %s17, 8
          %s1326 = scalar_lea.vmem %s4, %s1325
          // Predicated region
          $region90: #{_spatial_conv_jit.1} parent=88 // pred_check
            _
          $region91: #{_spatial_conv_jit.1} parent=88 // pred_check_branch
            %1328 = sbr.rel (0) target = $region93
          $region92: #{_spatial_conv_jit.1} parent=88 // pred_region
            // Predicated region
            $region94: #{_spatial_conv_jit.1} parent=92 // pred_check
              _
            $region95: #{_spatial_conv_jit.1} parent=92 // pred_check_branch
              %1330 = sbr.rel (0) target = $region97
            $region96: #{_spatial_conv_jit.1} parent=92 // pred_region
              // Predicated region
              $region109: #{_spatial_conv_jit.1} parent=96 // pred_check
                _
              $region110: #{_spatial_conv_jit.1} parent=96 // pred_check_branch
                %1375 = sbr.rel (0) target = $region112
              $region111: #{_spatial_conv_jit.1} parent=96 // pred_region
                loop: start=0, step=1, limit=1
                $region113: #{_spatial_conv_jit.1} parent=111 // loop_pre_header
                  _
                $region114: #{_spatial_conv_jit.1} parent=111 // loop_header
                  %s1377 = sphi 0, %s1381
                  %p1378 = scmp.ge.s32.totalorder %s1377, 1
                  %s1382 = sphi %s1321, %s1321
                  %s1383 = sphi %s1326, %s1326
                $region115: #{_spatial_conv_jit.1} parent=111 // loop_header_branch
                  %1380 = sbr.rel (%p1378) target = $region119
                $region116: #{_spatial_conv_jit.1} parent=111 // loop_body
                  %v1384 = vld [vmem:[%s1382] sm:$0xff]
                  %1385 = vst [vmem:[%s1383] sm:$0xff] %v1384
                  %v1386 = vld [vmem:[%s1382 + $0x8] sm:$0xff]
                  %1387 = vst [vmem:[%s1383 + $0x10] sm:$0xff] %v1386
                  %v1388 = vld [vmem:[%s1382 + $0x10] sm:$0xff]
                  %1389 = vst [vmem:[%s1383 + $0x20] sm:$0xff] %v1388
                  %v1390 = vld [vmem:[%s1382 + $0x18] sm:$0xff]
                  %1391 = vst [vmem:[%s1383 + $0x30] sm:$0xff] %v1390
                  %v1392 = vld [vmem:[%s1382 + $0x20] sm:$0xff]
                  %1393 = vst [vmem:[%s1383 + $0x40] sm:$0xff] %v1392
                  %v1394 = vld [vmem:[%s1382 + $0x28] sm:$0xff]
                  %1395 = vst [vmem:[%s1383 + $0x50] sm:$0xff] %v1394
                  %v1396 = vld [vmem:[%s1382 + $0x30] sm:$0xff]
                  %1397 = vst [vmem:[%s1383 + $0x60] sm:$0xff] %v1396
                  %v1398 = vld [vmem:[%s1382 + $0x38] sm:$0xff]
                  %1399 = vst [vmem:[%s1383 + $0x70] sm:$0xff] %v1398
                  %v1400 = vld [vmem:[%s1382 + $0x40] sm:$0xff]
                  %1401 = vst [vmem:[%s1383 + $0x80] sm:$0xff] %v1400
                  %v1402 = vld [vmem:[%s1382 + $0x48] sm:$0xff]
                  %1403 = vst [vmem:[%s1383 + $0x90] sm:$0xff] %v1402
                  %v1404 = vld [vmem:[%s1382 + $0x50] sm:$0xff]
                  %1405 = vst [vmem:[%s1383 + $0xa0] sm:$0xff] %v1404
                  %v1406 = vld [vmem:[%s1382 + $0x58] sm:$0xff]
                  %1407 = vst [vmem:[%s1383 + $0xb0] sm:$0xff] %v1406
                  %v1408 = vld [vmem:[%s1382 + $0x60] sm:$0xff]
                  %1409 = vst [vmem:[%s1383 + $0xc0] sm:$0xff] %v1408
                  %v1410 = vld [vmem:[%s1382 + $0x68] sm:$0xff]
                  %1411 = vst [vmem:[%s1383 + $0xd0] sm:$0xff] %v1410
                  %v1412 = vld [vmem:[%s1382 + $0x70] sm:$0xff]
                  %1413 = vst [vmem:[%s1383 + $0xe0] sm:$0xff] %v1412
                  %v1414 = vld [vmem:[%s1382 + $0x78] sm:$0xff]
                  %1415 = vst [vmem:[%s1383 + $0xf0] sm:$0xff] %v1414
                $region117: #{_spatial_conv_jit.1} parent=111 // loop_footer
                  %s1381 = sadd.s32 1, %s1377
                $region118: #{_spatial_conv_jit.1} parent=111 // loop_footer_branch
                  %1376 = sbr.rel target = $region114
                $region119: #{_spatial_conv_jit.1} parent=111 // loop_exit
                  _
              $region112: #{_spatial_conv_jit.1} parent=96 // pred_fallthru
                _
              // Predicated region
              $region120: #{_spatial_conv_jit.1} parent=96 // pred_check
                _
              $region121: #{_spatial_conv_jit.1} parent=96 // pred_check_branch
                %1417 = sbr.rel target = $region123
              $region122: #{_spatial_conv_jit.1} parent=96 // pred_region
                _
              $region123: #{_spatial_conv_jit.1} parent=96 // pred_fallthru
                _
            $region97: #{_spatial_conv_jit.1} parent=92 // pred_fallthru
              _
            // Predicated region
            $region98: #{_spatial_conv_jit.1} parent=92 // pred_check
              _
            $region99: #{_spatial_conv_jit.1} parent=92 // pred_check_branch
              %1332 = sbr.rel target = $region101
            $region100: #{_spatial_conv_jit.1} parent=92 // pred_region
              loop: start=0, step=1, limit=1
              $region102: #{_spatial_conv_jit.1} parent=100 // loop_pre_header
                _
              $region103: #{_spatial_conv_jit.1} parent=100 // loop_header
                %s1335 = sphi 0, %s1339
                %p1336 = scmp.ge.s32.totalorder %s1335, 1
                %s1340 = sphi %s1321, %s1321
                %s1341 = sphi %s1326, %s1326
              $region104: #{_spatial_conv_jit.1} parent=100 // loop_header_branch
                %1338 = sbr.rel (%p1336) target = $region108
              $region105: #{_spatial_conv_jit.1} parent=100 // loop_body
                %v1342 = vld [vmem:[%s1340] sm:$0xff]
                %1343 = vst [vmem:[%s1341] sm:$0xff] %v1342
                %v1344 = vld [vmem:[%s1340 + $0x8] sm:$0xff]
                %1345 = vst [vmem:[%s1341 + $0x10] sm:$0xff] %v1344
                %v1346 = vld [vmem:[%s1340 + $0x10] sm:$0xff]
                %1347 = vst [vmem:[%s1341 + $0x20] sm:$0xff] %v1346
                %v1348 = vld [vmem:[%s1340 + $0x18] sm:$0xff]
                %1349 = vst [vmem:[%s1341 + $0x30] sm:$0xff] %v1348
                %v1350 = vld [vmem:[%s1340 + $0x20] sm:$0xff]
                %1351 = vst [vmem:[%s1341 + $0x40] sm:$0xff] %v1350
                %v1352 = vld [vmem:[%s1340 + $0x28] sm:$0xff]
                %1353 = vst [vmem:[%s1341 + $0x50] sm:$0xff] %v1352
                %v1354 = vld [vmem:[%s1340 + $0x30] sm:$0xff]
                %1355 = vst [vmem:[%s1341 + $0x60] sm:$0xff] %v1354
                %v1356 = vld [vmem:[%s1340 + $0x38] sm:$0xff]
                %1357 = vst [vmem:[%s1341 + $0x70] sm:$0xff] %v1356
                %v1358 = vld [vmem:[%s1340 + $0x40] sm:$0xff]
                %1359 = vst [vmem:[%s1341 + $0x80] sm:$0xff] %v1358
                %v1360 = vld [vmem:[%s1340 + $0x48] sm:$0xff]
                %1361 = vst [vmem:[%s1341 + $0x90] sm:$0xff] %v1360
                %v1362 = vld [vmem:[%s1340 + $0x50] sm:$0xff]
                %1363 = vst [vmem:[%s1341 + $0xa0] sm:$0xff] %v1362
                %v1364 = vld [vmem:[%s1340 + $0x58] sm:$0xff]
                %1365 = vst [vmem:[%s1341 + $0xb0] sm:$0xff] %v1364
                %v1366 = vld [vmem:[%s1340 + $0x60] sm:$0xff]
                %1367 = vst [vmem:[%s1341 + $0xc0] sm:$0xff] %v1366
                %v1368 = vld [vmem:[%s1340 + $0x68] sm:$0xff]
                %1369 = vst [vmem:[%s1341 + $0xd0] sm:$0xff] %v1368
                %v1370 = vld [vmem:[%s1340 + $0x70] sm:$0xff]
                %1371 = vst [vmem:[%s1341 + $0xe0] sm:$0xff] %v1370
                %v1372 = vld [vmem:[%s1340 + $0x78] sm:$0xff]
                %1373 = vst [vmem:[%s1341 + $0xf0] sm:$0xff] %v1372
              $region106: #{_spatial_conv_jit.1} parent=100 // loop_footer
                %s1339 = sadd.s32 1, %s1335
              $region107: #{_spatial_conv_jit.1} parent=100 // loop_footer_branch
                %1334 = sbr.rel target = $region103
              $region108: #{_spatial_conv_jit.1} parent=100 // loop_exit
                _
            $region101: #{_spatial_conv_jit.1} parent=92 // pred_fallthru
              _
          $region93: #{_spatial_conv_jit.1} parent=88 // pred_fallthru
            _
          %1418 = vnop
        $region89: #{_spatial_conv_jit.1} parent=72 // pred_fallthru
          _
      $region73: #{_spatial_conv_jit.1} parent=5 // pred_fallthru
        _
      %p1419 = scmp.le.s32.totalorder 2, %s12
      // Predicated region
      $region124: #{_spatial_conv_jit.1} parent=5 // pred_check
        %p1420 = pneg %p1419
      $region125: #{_spatial_conv_jit.1} parent=5 // pred_check_branch
        %1422 = sbr.rel (%p1420) target = $region127
      $region126: #{_spatial_conv_jit.1} parent=5 // pred_region
        %s1423 = ssub.s32 %s12, 2
        // Predicated region
        $region128: #{_spatial_conv_jit.1} parent=126 // pred_check
          %p1424 = pneg %p130
        $region129: #{_spatial_conv_jit.1} parent=126 // pred_check_branch
          %1426 = sbr.rel (%p1424) target = $region131
        $region130: #{_spatial_conv_jit.1} parent=126 // pred_region
          %s1427 = sand.u32 %s115, 1
          %s1428 = sand.u32 %s115, 1
          %s1429 = smul.addr %s1428, 128
          %s1430 = scalar_lea.vmem [#allocation7], %s1429
        $region131: #{_spatial_conv_jit.1} parent=126 // pred_fallthru
          _
      $region127: #{_spatial_conv_jit.1} parent=5 // pred_fallthru
        _
    $region6: #{_spatial_conv_jit.1} parent=1 // loop_footer
      %s16 = sadd.s32 1, %s12
    $region7: #{_spatial_conv_jit.1} parent=1 // loop_footer_branch
      %11 = sbr.rel target = $region3
    $region8: #{_spatial_conv_jit.1} parent=1 // loop_exit
      _
    %1431 = vsyncpa [#allocation4], 1
    %s1432 = scalar_lea.sflag [#allocation4], 1
    %1433 = vsyncpa %s1432, 1
    %1434 = vsyncpa [#allocation6], 1

</llo_original>
